<compile_context>
chip_gen: v7x
topology: tpu7x:2x2x1
jax: 0.10.0
libtpu: 0.0.40
codegen_flags: <defaults>
</compile_context>

<pallas_src>
import functools

import jax
import jax.numpy as jnp
from jax.experimental import pallas as pl
from jax.experimental.pallas import tpu as pltpu

LEAKY_SLOPE = 0.01   # nn.LeakyReLU default negative_slope
GN_EPS = 1e-5        # nn.GroupNorm default eps


# ---------------------------------------------------------------------------
# Pallas kernels
# ---------------------------------------------------------------------------
def _conv_matmul_kernel(w_ref, a_ref, b_ref, o_ref):
    # w: (Cout, K) bf16 (resident), a: (K, tm) bf16 (streamed over M tiles),
    # b: (Cout, 1) f32, o: (Cout, tm) f32 — lane-dense output tile.
    acc = jnp.dot(w_ref[...], a_ref[...], preferred_element_type=jnp.float32)
    o_ref[...] = acc + b_ref[...]


def _gn_leaky_kernel(x_ref, g_ref, b_ref, o_ref, *, num_groups, eps, slope):
    # x: (C, S) — one sample per grid step; channels on sublanes, spatial on
    # lanes.  Per-channel lane reductions first, then a tiny per-group reduce.
    x = x_ref[...]
    C, S = x.shape
    Cg = C // num_groups
    cnt = float(Cg * S)

    s1 = jnp.sum(x, axis=1, keepdims=True)                            # (C, 1)
    gmean = jnp.sum(s1.reshape(num_groups, Cg), axis=1,
                    keepdims=True) / cnt                              # (G, 1)
    mean_c = jnp.broadcast_to(gmean[:, None, :],
                              (num_groups, Cg, 1)).reshape(C, 1)      # (C, 1)

    xm = x - mean_c
    s2 = jnp.sum(xm * xm, axis=1, keepdims=True)                      # (C, 1)
    gvar = jnp.sum(s2.reshape(num_groups, Cg), axis=1,
                   keepdims=True) / cnt                               # (G, 1)
    rstd = jax.lax.rsqrt(gvar + eps)                                  # (G, 1)
    rstd_c = jnp.broadcast_to(rstd[:, None, :],
                              (num_groups, Cg, 1)).reshape(C, 1)      # (C, 1)

    y = xm * rstd_c * g_ref[...] + b_ref[...]
    o_ref[...] = jnp.where(y >= 0, y, slope * y)


# ---------------------------------------------------------------------------
# Glue: im2col in channels-major layout (patch extraction only; matmul in Pallas)
# ---------------------------------------------------------------------------
def _round_up(x, m):
    return (x + m - 1) // m * m


def _pick_m_tile(M):
    for t in (512, 256, 128):
        if M % t == 0:
            return t, M
    return 128, _round_up(M, 128)


def _im2col_cmajor(xc, k, stride, pad):
    """xc: (C, N, D, H, W) -> A: (C*k^3, N*Do*Ho*Wo).

    K ordering is (c, kd, kh, kw), matching w.reshape(Cout, Cin*k^3); in this
    layout the k^3-inflated tensor never needs a transpose (free reshape only).
    """
    C, N, D, H, W = xc.shape
    xp = jnp.pad(xc, ((0, 0), (0, 0), (pad, pad), (pad, pad), (pad, pad)))
    Do = (D + 2 * pad - k) // stride + 1
    Ho = (H + 2 * pad - k) // stride + 1
    Wo = (W + 2 * pad - k) // stride + 1
    taps = []
    for kd in range(k):
        for kh in range(k):
            for kw in range(k):
                taps.append(
                    xp[:, :,
                       kd:kd + stride * Do:stride,
                       kh:kh + stride * Ho:stride,
                       kw:kw + stride * Wo:stride])
    a = jnp.stack(taps, axis=1)                       # (C, k^3, N, Do, Ho, Wo)
    a = a.reshape(C * k * k * k, N * Do * Ho * Wo)    # contiguous merge
    return a, (Do, Ho, Wo)


def conv3d_pallas(xc, w, b, stride, pad=1, compute_dtype=jnp.bfloat16):
    """Conv3d (PyTorch semantics) via im2col + tiled Pallas matmul.

    xc: (Cin, N, D, H, W).  Returns (Cout, N, Do, Ho, Wo) in f32.
    """
    Cout, Cin, k, _, _ = w.shape
    _, N, _, _, _ = xc.shape
    # Build patches directly in the low-precision matmul dtype (halves A bytes).
    a, (Do, Ho, Wo) = _im2col_cmajor(xc.astype(compute_dtype), k, stride, pad)
    K, M = a.shape
    tm, M_pad = _pick_m_tile(M)
    if M_pad != M:
        a = jnp.pad(a, ((0, 0), (0, M_pad - M)))

    w_mat = w.reshape(Cout, K).astype(compute_dtype)   # (Cout, K), same K order
    bias = b.reshape(Cout, 1).astype(jnp.float32)

    out = pl.pallas_call(
        _conv_matmul_kernel,
        out_shape=jax.ShapeDtypeStruct((Cout, M_pad), jnp.float32),
        grid=(M_pad // tm,),
        in_specs=[
            pl.BlockSpec((Cout, K), lambda i: (0, 0)),   # weights: resident
            pl.BlockSpec((K, tm), lambda i: (0, i)),     # patches: streamed
            pl.BlockSpec((Cout, 1), lambda i: (0, 0)),   # bias: resident
        ],
        out_specs=pl.BlockSpec((Cout, tm), lambda i: (0, i)),  # lane-dense tile
        compiler_params=pltpu.CompilerParams(
            dimension_semantics=("parallel",)),
    )(w_mat, a, bias)

    if M_pad != M:
        out = out[:, :M]
    return out.reshape(Cout, N, Do, Ho, Wo)


def groupnorm_leaky_pallas(xc, gamma, beta, num_groups):
    """Fused GroupNorm(affine) + LeakyReLU.  xc: (C, N, D, H, W) f32."""
    C, N, D, H, W = xc.shape
    S = D * H * W
    assert S % 128 == 0 or N == 1, (
        "GroupNorm kernel tiles one sample per grid step on the lane axis; "
        "per-sample spatial size must be a multiple of 128 (or N == 1).")
    x2 = xc.reshape(C, N * S)
    g2 = gamma.reshape(C, 1).astype(jnp.float32)
    b2 = beta.reshape(C, 1).astype(jnp.float32)

    kern = functools.partial(_gn_leaky_kernel, num_groups=num_groups,
                             eps=GN_EPS, slope=LEAKY_SLOPE)
    out = pl.pallas_call(
        kern,
        out_shape=jax.ShapeDtypeStruct((C, N * S), jnp.float32),
        grid=(N,),
        in_specs=[
            pl.BlockSpec((C, S), lambda n: (0, n)),   # one sample per step
            pl.BlockSpec((C, 1), lambda n: (0, 0)),   # gamma (resident, tiny)
            pl.BlockSpec((C, 1), lambda n: (0, 0)),   # beta  (resident, tiny)
        ],
        out_specs=pl.BlockSpec((C, S), lambda n: (0, n)),
        compiler_params=pltpu.CompilerParams(
            dimension_semantics=("parallel",)),
    )(x2, g2, b2)
    return out.reshape(C, N, D, H, W)


# ---------------------------------------------------------------------------
# DoubleConv forward
# ---------------------------------------------------------------------------
def double_conv_forward(x, params, num_groups=8, strides=(2, 1),
                        compute_dtype=jnp.bfloat16):
    """x: (N, Cin, D, H, W) NCDHW (PyTorch layout).  Returns NCDHW."""
    # Single layout change at the API boundary; all intermediate stages stay in
    # channels-major (C, N, D, H, W) so no activation transposes between stages.
    xc = jnp.transpose(x, (1, 0, 2, 3, 4))
    y = conv3d_pallas(xc, params["w1"], params["b1"], stride=strides[0], pad=1,
                      compute_dtype=compute_dtype)
    y = groupnorm_leaky_pallas(y, params["gn1_w"], params["gn1_b"], num_groups)
    y = conv3d_pallas(y, params["w2"], params["b2"], stride=strides[1], pad=1,
                      compute_dtype=compute_dtype)
    y = groupnorm_leaky_pallas(y, params["gn2_w"], params["gn2_b"], num_groups)
    return jnp.transpose(y, (1, 0, 2, 3, 4))   # back to NCDHW


def init_params(key, in_channels, out_channels, k=3):
    k1, k2, k3, k4 = jax.random.split(key, 4)
    fan1 = in_channels * k ** 3
    fan2 = out_channels * k ** 3
    return {
        "w1": jax.random.normal(k1, (out_channels, in_channels, k, k, k),
                                jnp.float32) * (1.0 / jnp.sqrt(fan1)),
        "b1": jax.random.normal(k2, (out_channels,), jnp.float32) * 0.01,
        "w2": jax.random.normal(k3, (out_channels, out_channels, k, k, k),
                                jnp.float32) * (1.0 / jnp.sqrt(fan2)),
        "b2": jax.random.normal(k4, (out_channels,), jnp.float32) * 0.01,
        # GroupNorm default init: weight=1, bias=0
        "gn1_w": jnp.ones((out_channels,), jnp.float32),
        "gn1_b": jnp.zeros((out_channels,), jnp.float32),
        "gn2_w": jnp.ones((out_channels,), jnp.float32),
        "gn2_b": jnp.zeros((out_channels,), jnp.float32),
    }


if __name__ == "__main__":
    in_channels, out_channels, num_groups = 4, 8, 8
    key = jax.random.PRNGKey(0)
    kx, kp = jax.random.split(key)

    # NCDHW input: (N=2, Cin=4, D=16, H=16, W=16)
    x = jax.random.normal(kx, (2, in_channels, 16, 16, 16), jnp.float32)
    params = init_params(kp, in_channels, out_channels)

    fwd = jax.jit(lambda xx: double_conv_forward(xx, params,
                                                 num_groups=num_groups,
                                                 strides=(2, 1)))
    out = fwd(x)
    jax.block_until_ready(out)
    assert out.shape == (2, out_channels, 8, 8, 8), out.shape
    print("KERNEL_OK")
</pallas_src>

<mosaic_0001>
module attributes {stable_mosaic.version = 11 : i64} {
  func.func @_conv_matmul_kernel(%arg0: i32, %arg1: memref<8x108xbf16, #tpu.memory_space<vmem>>, %arg2: memref<108x512xbf16, #tpu.memory_space<vmem>>, %arg3: memref<8x1xf32, #tpu.memory_space<vmem>>, %arg4: memref<8x512xf32, #tpu.memory_space<vmem>>) attributes {dimension_semantics = [#tpu.dimension_semantics<parallel>], iteration_bounds = array<i64: 2>, scalar_prefetch = 0 : i64, scratch_operands = 0 : i64, tpu.core_type = #tpu.core_type<tc>, window_params = [{pipeline_mode = #tpu.pipeline_mode<synchronous>, transform_indices = @transform_0, window_bounds = array<i64: 8, 108>}, {transform_indices = @transform_1, window_bounds = array<i64: 108, 512>}, {pipeline_mode = #tpu.pipeline_mode<synchronous>, transform_indices = @transform_2, window_bounds = array<i64: 8, 1>}, {transform_indices = @transform_3, window_bounds = array<i64: 8, 512>}]} {
    %c0 = arith.constant 0 : index
    %c0_0 = arith.constant 0 : index
    %0 = vector.load %arg1[%c0, %c0_0] : memref<8x108xbf16, #tpu.memory_space<vmem>>, vector<8x108xbf16>
    %c0_1 = arith.constant 0 : index
    %c0_2 = arith.constant 0 : index
    %1 = vector.load %arg2[%c0_1, %c0_2] : memref<108x512xbf16, #tpu.memory_space<vmem>>, vector<108x512xbf16>
    %cst = arith.constant dense<0.000000e+00> : vector<8x512xf32>
    %2 = tpu.matmul %0, %1, %cst {dimension_numbers = #tpu.dot_dimension_numbers<[1], [0], [0], [1], [0, 0, 1, 1], [], []>} : vector<8x108xbf16>, vector<108x512xbf16>, vector<8x512xf32> -> vector<8x512xf32>
    %c0_3 = arith.constant 0 : index
    %c0_4 = arith.constant 0 : index
    %3 = vector.load %arg3[%c0_3, %c0_4] : memref<8x1xf32, #tpu.memory_space<vmem>>, vector<8x1xf32>
    %4 = vector.broadcast %3 : vector<8x1xf32> to vector<8x512xf32>
    %5 = arith.addf %2, %4 : vector<8x512xf32>
    %c0_5 = arith.constant 0 : index
    %c0_6 = arith.constant 0 : index
    %6 = vector.load %arg4[%c0_5, %c0_6] : memref<8x512xf32, #tpu.memory_space<vmem>>, vector<8x512xf32>
    tpu.vector_store %arg4[%c0_5, %c0_6], %5 {strides = array<i32>} : memref<8x512xf32, #tpu.memory_space<vmem>>, vector<8x512xf32>,
    return
  }
  func.func @transform_0(%arg0: i32) -> (i32, i32) {
    %c0_i32 = arith.constant 0 : i32
    %c0_i32_0 = arith.constant 0 : i32
    %c0_i32_1 = arith.constant 0 : i32
    return %c0_i32, %c0_i32_0 : i32, i32
  }
  func.func @transform_1(%arg0: i32) -> (i32, i32) {
    %c0_i32 = arith.constant 0 : i32
    %c0_i32_0 = arith.constant 0 : i32
    return %c0_i32, %arg0 : i32, i32
  }
  func.func @transform_2(%arg0: i32) -> (i32, i32) {
    %c0_i32 = arith.constant 0 : i32
    %c0_i32_0 = arith.constant 0 : i32
    %c0_i32_1 = arith.constant 0 : i32
    return %c0_i32, %c0_i32_0 : i32, i32
  }
  func.func @transform_3(%arg0: i32) -> (i32, i32) {
    %c0_i32 = arith.constant 0 : i32
    %c0_i32_0 = arith.constant 0 : i32
    return %c0_i32, %arg0 : i32, i32
  }
}

module attributes {stable_mosaic.version = 11 : i64} {
  func.func @_gn_leaky_kernel(%arg0: i32, %arg1: memref<8x512xf32, #tpu.memory_space<vmem>>, %arg2: memref<8x1xf32, #tpu.memory_space<vmem>>, %arg3: memref<8x1xf32, #tpu.memory_space<vmem>>, %arg4: memref<8x512xf32, #tpu.memory_space<vmem>>) attributes {dimension_semantics = [#tpu.dimension_semantics<parallel>], iteration_bounds = array<i64: 2>, scalar_prefetch = 0 : i64, scratch_operands = 0 : i64, tpu.core_type = #tpu.core_type<tc>, window_params = [{transform_indices = @transform_0, window_bounds = array<i64: 8, 512>}, {pipeline_mode = #tpu.pipeline_mode<synchronous>, transform_indices = @transform_1, window_bounds = array<i64: 8, 1>}, {pipeline_mode = #tpu.pipeline_mode<synchronous>, transform_indices = @transform_2, window_bounds = array<i64: 8, 1>}, {transform_indices = @transform_3, window_bounds = array<i64: 8, 512>}]} {
    %c0 = arith.constant 0 : index
    %c0_0 = arith.constant 0 : index
    %0 = vector.load %arg1[%c0, %c0_0] : memref<8x512xf32, #tpu.memory_space<vmem>>, vector<8x512xf32>
    %cst = arith.constant dense<0.000000e+00> : vector<8xf32>
    %1 = vector.multi_reduction <add>, %0, %cst [1] : vector<8x512xf32> to vector<8xf32>
    %2 = vector.shape_cast %1 : vector<8xf32> to vector<8x1xf32>
    %cst_1 = arith.constant dense<0.000000e+00> : vector<8xf32>
    %3 = vector.multi_reduction <add>, %2, %cst_1 [1] : vector<8x1xf32> to vector<8xf32>
    %4 = vector.shape_cast %3 : vector<8xf32> to vector<8x1xf32>
    %cst_2 = arith.constant 5.120000e+02 : f32
    %5 = vector.broadcast %cst_2 : f32 to vector<8x1xf32>
    %6 = arith.divf %4, %5 : vector<8x1xf32>
    %7 = vector.shape_cast %6 : vector<8x1xf32> to vector<8x1x1xf32>
    %8 = vector.shape_cast %7 : vector<8x1x1xf32> to vector<8x1xf32>
    %9 = vector.broadcast %8 : vector<8x1xf32> to vector<8x512xf32>
    %10 = arith.subf %0, %9 : vector<8x512xf32>
    %11 = arith.mulf %10, %10 : vector<8x512xf32>
    %cst_3 = arith.constant dense<0.000000e+00> : vector<8xf32>
    %12 = vector.multi_reduction <add>, %11, %cst_3 [1] : vector<8x512xf32> to vector<8xf32>
    %13 = vector.shape_cast %12 : vector<8xf32> to vector<8x1xf32>
    %cst_4 = arith.constant dense<0.000000e+00> : vector<8xf32>
    %14 = vector.multi_reduction <add>, %13, %cst_4 [1] : vector<8x1xf32> to vector<8xf32>
    %15 = vector.shape_cast %14 : vector<8xf32> to vector<8x1xf32>
    %cst_5 = arith.constant 5.120000e+02 : f32
    %16 = vector.broadcast %cst_5 : f32 to vector<8x1xf32>
    %17 = arith.divf %15, %16 : vector<8x1xf32>
    %cst_6 = arith.constant 9.99999974E-6 : f32
    %18 = vector.broadcast %cst_6 : f32 to vector<8x1xf32>
    %19 = arith.addf %17, %18 : vector<8x1xf32>
    %20 = math.rsqrt %19 : vector<8x1xf32>
    %21 = vector.shape_cast %20 : vector<8x1xf32> to vector<8x1x1xf32>
    %22 = vector.shape_cast %21 : vector<8x1x1xf32> to vector<8x1xf32>
    %23 = vector.broadcast %22 : vector<8x1xf32> to vector<8x512xf32>
    %24 = arith.mulf %10, %23 : vector<8x512xf32>
    %c0_7 = arith.constant 0 : index
    %c0_8 = arith.constant 0 : index
    %25 = vector.load %arg2[%c0_7, %c0_8] : memref<8x1xf32, #tpu.memory_space<vmem>>, vector<8x1xf32>
    %26 = vector.broadcast %25 : vector<8x1xf32> to vector<8x512xf32>
    %27 = arith.mulf %24, %26 : vector<8x512xf32>
    %c0_9 = arith.constant 0 : index
    %c0_10 = arith.constant 0 : index
    %28 = vector.load %arg3[%c0_9, %c0_10] : memref<8x1xf32, #tpu.memory_space<vmem>>, vector<8x1xf32>
    %29 = vector.broadcast %28 : vector<8x1xf32> to vector<8x512xf32>
    %30 = arith.addf %27, %29 : vector<8x512xf32>
    %cst_11 = arith.constant 0.000000e+00 : f32
    %31 = vector.broadcast %cst_11 : f32 to vector<8x512xf32>
    %32 = arith.cmpf oge, %30, %31 : vector<8x512xf32>
    %cst_12 = arith.constant 0.00999999977 : f32
    %33 = vector.broadcast %cst_12 : f32 to vector<8x512xf32>
    %34 = arith.mulf %33, %30 : vector<8x512xf32>
    %35 = arith.select %32, %30, %34 : vector<8x512xi1>, vector<8x512xf32>
    %c0_13 = arith.constant 0 : index
    %c0_14 = arith.constant 0 : index
    %36 = vector.load %arg4[%c0_13, %c0_14] : memref<8x512xf32, #tpu.memory_space<vmem>>, vector<8x512xf32>
    tpu.vector_store %arg4[%c0_13, %c0_14], %35 {strides = array<i32>} : memref<8x512xf32, #tpu.memory_space<vmem>>, vector<8x512xf32>,
    return
  }
  func.func @transform_0(%arg0: i32) -> (i32, i32) {
    %c0_i32 = arith.constant 0 : i32
    %c0_i32_0 = arith.constant 0 : i32
    return %c0_i32, %arg0 : i32, i32
  }
  func.func @transform_1(%arg0: i32) -> (i32, i32) {
    %c0_i32 = arith.constant 0 : i32
    %c0_i32_0 = arith.constant 0 : i32
    %c0_i32_1 = arith.constant 0 : i32
    return %c0_i32, %c0_i32_0 : i32, i32
  }
  func.func @transform_2(%arg0: i32) -> (i32, i32) {
    %c0_i32 = arith.constant 0 : i32
    %c0_i32_0 = arith.constant 0 : i32
    %c0_i32_1 = arith.constant 0 : i32
    return %c0_i32, %c0_i32_0 : i32, i32
  }
  func.func @transform_3(%arg0: i32) -> (i32, i32) {
    %c0_i32 = arith.constant 0 : i32
    %c0_i32_0 = arith.constant 0 : i32
    return %c0_i32, %arg0 : i32, i32
  }
}

module attributes {stable_mosaic.version = 11 : i64} {
  func.func @_conv_matmul_kernel(%arg0: i32, %arg1: memref<8x216xbf16, #tpu.memory_space<vmem>>, %arg2: memref<216x512xbf16, #tpu.memory_space<vmem>>, %arg3: memref<8x1xf32, #tpu.memory_space<vmem>>, %arg4: memref<8x512xf32, #tpu.memory_space<vmem>>) attributes {dimension_semantics = [#tpu.dimension_semantics<parallel>], iteration_bounds = array<i64: 2>, scalar_prefetch = 0 : i64, scratch_operands = 0 : i64, tpu.core_type = #tpu.core_type<tc>, window_params = [{pipeline_mode = #tpu.pipeline_mode<synchronous>, transform_indices = @transform_0, window_bounds = array<i64: 8, 216>}, {transform_indices = @transform_1, window_bounds = array<i64: 216, 512>}, {pipeline_mode = #tpu.pipeline_mode<synchronous>, transform_indices = @transform_2, window_bounds = array<i64: 8, 1>}, {transform_indices = @transform_3, window_bounds = array<i64: 8, 512>}]} {
    %c0 = arith.constant 0 : index
    %c0_0 = arith.constant 0 : index
    %0 = vector.load %arg1[%c0, %c0_0] : memref<8x216xbf16, #tpu.memory_space<vmem>>, vector<8x216xbf16>
    %c0_1 = arith.constant 0 : index
    %c0_2 = arith.constant 0 : index
    %1 = vector.load %arg2[%c0_1, %c0_2] : memref<216x512xbf16, #tpu.memory_space<vmem>>, vector<216x512xbf16>
    %cst = arith.constant dense<0.000000e+00> : vector<8x512xf32>
    %2 = tpu.matmul %0, %1, %cst {dimension_numbers = #tpu.dot_dimension_numbers<[1], [0], [0], [1], [0, 0, 1, 1], [], []>} : vector<8x216xbf16>, vector<216x512xbf16>, vector<8x512xf32> -> vector<8x512xf32>
    %c0_3 = arith.constant 0 : index
    %c0_4 = arith.constant 0 : index
    %3 = vector.load %arg3[%c0_3, %c0_4] : memref<8x1xf32, #tpu.memory_space<vmem>>, vector<8x1xf32>
    %4 = vector.broadcast %3 : vector<8x1xf32> to vector<8x512xf32>
    %5 = arith.addf %2, %4 : vector<8x512xf32>
    %c0_5 = arith.constant 0 : index
    %c0_6 = arith.constant 0 : index
    %6 = vector.load %arg4[%c0_5, %c0_6] : memref<8x512xf32, #tpu.memory_space<vmem>>, vector<8x512xf32>
    tpu.vector_store %arg4[%c0_5, %c0_6], %5 {strides = array<i32>} : memref<8x512xf32, #tpu.memory_space<vmem>>, vector<8x512xf32>,
    return
  }
  func.func @transform_0(%arg0: i32) -> (i32, i32) {
    %c0_i32 = arith.constant 0 : i32
    %c0_i32_0 = arith.constant 0 : i32
    %c0_i32_1 = arith.constant 0 : i32
    return %c0_i32, %c0_i32_0 : i32, i32
  }
  func.func @transform_1(%arg0: i32) -> (i32, i32) {
    %c0_i32 = arith.constant 0 : i32
    %c0_i32_0 = arith.constant 0 : i32
    return %c0_i32, %arg0 : i32, i32
  }
  func.func @transform_2(%arg0: i32) -> (i32, i32) {
    %c0_i32 = arith.constant 0 : i32
    %c0_i32_0 = arith.constant 0 : i32
    %c0_i32_1 = arith.constant 0 : i32
    return %c0_i32, %c0_i32_0 : i32, i32
  }
  func.func @transform_3(%arg0: i32) -> (i32, i32) {
    %c0_i32 = arith.constant 0 : i32
    %c0_i32_0 = arith.constant 0 : i32
    return %c0_i32, %arg0 : i32, i32
  }
}

</mosaic_0001>

<llo_original>
// kernel: _lambda_.4
$region0: #{_lambda_.4}
  #allocation0 [shape = 'u32[]', space=smem, size = 0x4, offset = 0x4, fixed_abs, tag = 'smem constant byte address 0x4 - core index']
  #allocation1 [shape = 'u32[144,128]{1,0:T(1,128)}', space=vmem, size = 0x12000, scoped, tag = 'internal scratch']
  %s0 = inlined_call_operand.vmem [shape: bf16[8,108], index: 0, kind: input, shape index: {}]
  %s1 = inlined_call_operand.vmem [shape: bf16[108,1024], index: 1, kind: input, shape index: {}]
  %s2 = inlined_call_operand.vmem [shape: f32[8,1], index: 2, kind: input, shape index: {}]
  %s3 = inlined_call_operand.vmem [shape: f32[8,1024], index: 3, kind: output, shape index: {}]
  %s4 = sld [smem:[#allocation0]]
  $region68: #{_lambda_.4} parent=0
    _
  %s6 = ssub.s32 1, %s4
  %s7 = scalar_select 0, %s6, %s4
  $region1: #{_lambda_.4} parent=0
    #allocation2 [shape = 'u8[229376]{0}', space=vmem, size = 0x38000, scoped, tag = 'input window, operand 1']
    loop: start=0, step=1, limit=4
    $region2: #{_lambda_.4} parent=1 // loop_pre_header
      _
    $region3: #{_lambda_.4} parent=1 // loop_header
      %s9 = sphi 0, %s13
      %p10 = scmp.ge.s32.totalorder %s9, 4
      %s17 = sphi 0, %s17
      %s19 = sphi 0, %s17
      %s20 = sphi 0, %s19
      %s34 = sphi 0, %s20
      %s40 = sphi 0, %s42
      %s43 = sphi 0, %s40
      %s44 = sphi 0, %s43
      %s60 = sphi 0, %s44
      %s64 = sphi 0, %s64
      %s66 = sphi 0, %s64
      %s67 = sphi 0, %s66
      %s81 = sphi 0, %s67
      %s87 = sphi 0, %s89
      %s90 = sphi 0, %s87
      %s91 = sphi 0, %s90
      %s107 = sphi 0, %s91
    $region4: #{_lambda_.4} parent=1 // loop_header_branch
      %12 = sbr.rel (%p10) target = $region8
    $region5: #{_lambda_.4} parent=1 // loop_body
      %s14 = ssub.s32 %s9, 1
      %s15 = ssub.s32 %s9, 2
      %s16 = sadd.s32 %s9, 1
      %s18 = sadd.s32 %s17, 1
      %p21 = scmp.eq.s32.totalorder %s9, 1
      %p22 = scmp.ne.s32.totalorder %s17, %s19
      %p23 = scmp.eq.s32.totalorder %s9, 0
      %p24 = por %p22, %p23
      %p25 = scmp.ne.s32.totalorder %s17, %s19
      %p26 = scmp.eq.s32.totalorder %s14, 1
      %p27 = por %p25, %p26
      %p28 = scmp.ne.s32.totalorder %s19, %s20
      %p29 = scmp.eq.s32.totalorder %s14, 0
      %p30 = por %p28, %p29
      %p31 = scmp.ne.s32.totalorder %s19, %s20
      %p32 = scmp.eq.s32.totalorder %s15, 1
      %p33 = por %p31, %p32
      %p35 = scmp.ne.s32.totalorder %s20, %s34
      %p36 = scmp.eq.s32.totalorder %s15, 0
      %p37 = por %p35, %p36
      %s38 = ssub.s32 %s9, %s16
      %p39 = scmp.eq.s32.totalorder %s38, 0
      %s41 = sadd.s32 %s40, 1
      %s42 = scalar_select %p39, %s40, %s41
      %p45 = pneg %p39
      %p46 = scmp.eq.s32.totalorder %s9, 1
      %p47 = por %p45, %p46
      %p48 = scmp.ne.s32.totalorder %s40, %s43
      %p49 = scmp.eq.s32.totalorder %s9, 0
      %p50 = por %p48, %p49
      %p51 = scmp.ne.s32.totalorder %s40, %s43
      %p52 = scmp.eq.s32.totalorder %s14, 1
      %p53 = por %p51, %p52
      %p54 = scmp.ne.s32.totalorder %s43, %s44
      %p55 = scmp.eq.s32.totalorder %s14, 0
      %p56 = por %p54, %p55
      %p57 = scmp.ne.s32.totalorder %s43, %s44
      %p58 = scmp.eq.s32.totalorder %s15, 1
      %p59 = por %p57, %p58
      %p61 = scmp.ne.s32.totalorder %s44, %s60
      %p62 = scmp.eq.s32.totalorder %s15, 0
      %p63 = por %p61, %p62
      %s65 = sadd.s32 %s64, 1
      %p68 = scmp.eq.s32.totalorder %s9, 1
      %p69 = scmp.ne.s32.totalorder %s64, %s66
      %p70 = scmp.eq.s32.totalorder %s9, 0
      %p71 = por %p69, %p70
      %p72 = scmp.ne.s32.totalorder %s64, %s66
      %p73 = scmp.eq.s32.totalorder %s14, 1
      %p74 = por %p72, %p73
      %p75 = scmp.ne.s32.totalorder %s66, %s67
      %p76 = scmp.eq.s32.totalorder %s14, 0
      %p77 = por %p75, %p76
      %p78 = scmp.ne.s32.totalorder %s66, %s67
      %p79 = scmp.eq.s32.totalorder %s15, 1
      %p80 = por %p78, %p79
      %p82 = scmp.ne.s32.totalorder %s67, %s81
      %p83 = scmp.eq.s32.totalorder %s15, 0
      %p84 = por %p82, %p83
      %s85 = ssub.s32 %s9, %s16
      %p86 = scmp.eq.s32.totalorder %s85, 0
      %s88 = sadd.s32 %s87, 1
      %s89 = scalar_select %p86, %s87, %s88
      %p92 = pneg %p86
      %p93 = scmp.eq.s32.totalorder %s9, 1
      %p94 = por %p92, %p93
      %p95 = scmp.ne.s32.totalorder %s87, %s90
      %p96 = scmp.eq.s32.totalorder %s9, 0
      %p97 = por %p95, %p96
      %p98 = scmp.ne.s32.totalorder %s87, %s90
      %p99 = scmp.eq.s32.totalorder %s14, 1
      %p100 = por %p98, %p99
      %p101 = scmp.ne.s32.totalorder %s90, %s91
      %p102 = scmp.eq.s32.totalorder %s14, 0
      %p103 = por %p101, %p102
      %p104 = scmp.ne.s32.totalorder %s90, %s91
      %p105 = scmp.eq.s32.totalorder %s15, 1
      %p106 = por %p104, %p105
      %p108 = scmp.ne.s32.totalorder %s91, %s107
      %p109 = scmp.eq.s32.totalorder %s15, 0
      %p110 = por %p108, %p109
      %p111 = scmp.le.s32.totalorder 1, %s9
      %p112 = scmp.lt.s32.totalorder %s9, 3
      %p113 = pnand %p111, %p112
      %p114 = pneg %p113
      // Predicated region
      $region9: #{_lambda_.4} parent=5 // pred_check
        _
      $region10: #{_lambda_.4} parent=5 // pred_check_branch
        %116 = sbr.rel (%p113) target = $region12
      $region11: #{_lambda_.4} parent=5 // pred_region
        %s117 = ssub.s32 %s9, 1
        // Predicated region
        $region13: #{_lambda_.4} parent=11 // pred_check
          %p118 = pneg %p30
        $region14: #{_lambda_.4} parent=11 // pred_check_branch
          %120 = sbr.rel (%p118) target = $region16
        $region15: #{_lambda_.4} parent=11 // pred_region
          _
        $region16: #{_lambda_.4} parent=11 // pred_fallthru
          _
        // Predicated region
        $region17: #{_lambda_.4} parent=11 // pred_check
          %p121 = pneg %p77
        $region18: #{_lambda_.4} parent=11 // pred_check_branch
          %123 = sbr.rel (%p121) target = $region20
        $region19: #{_lambda_.4} parent=11 // pred_region
          _
        $region20: #{_lambda_.4} parent=11 // pred_fallthru
          _
      $region12: #{_lambda_.4} parent=5 // pred_fallthru
        _
      %p124 = scmp.lt.s32.totalorder %s9, 2
      // Predicated region
      $region21: #{_lambda_.4} parent=5 // pred_check
        %p125 = pneg %p124
      $region22: #{_lambda_.4} parent=5 // pred_check_branch
        %127 = sbr.rel (%p125) target = $region24
      $region23: #{_lambda_.4} parent=5 // pred_region
        // Predicated region
        $region25: #{_lambda_.4} parent=23 // pred_check
          %p128 = pneg %p50
        $region26: #{_lambda_.4} parent=23 // pred_check_branch
          %130 = sbr.rel (%p128) target = $region28
        $region27: #{_lambda_.4} parent=23 // pred_region
          %s131 = sand.u32 %s40, 1
          %s132 = sand.u32 %s40, 1
          %s133 = smul.addr %s132, 224
          %s134 = scalar_lea.vmem [#allocation2], %s133
          %s135 = smul.u32 4, %s9
          %s136 = smul.addr %s135, 4
          %s137 = scalar_lea.vmem %s1, %s136
          // Predicated region
          $region29: #{_lambda_.4} parent=27 // pred_check
            _
          $region30: #{_lambda_.4} parent=27 // pred_check_branch
            %139 = sbr.rel (0) target = $region32
          $region31: #{_lambda_.4} parent=27 // pred_region
            // Predicated region
            $region33: #{_lambda_.4} parent=31 // pred_check
              _
            $region34: #{_lambda_.4} parent=31 // pred_check_branch
              %141 = sbr.rel (0) target = $region36
            $region35: #{_lambda_.4} parent=31 // pred_region
              loop: start=0, step=1, limit=1
              $region37: #{_lambda_.4} parent=35 // loop_pre_header
                _
              $region38: #{_lambda_.4} parent=35 // loop_header
                %s143 = sphi 0, %s147
                %p144 = scmp.ge.s32.totalorder %s143, 1
                %s148 = sphi %s137, %s137
                %s149 = sphi %s134, %s134
              $region39: #{_lambda_.4} parent=35 // loop_header_branch
                %146 = sbr.rel (%p144) target = $region43
              $region40: #{_lambda_.4} parent=35 // loop_body
                %v150 = vld [vmem:[%s148] sm:$0xff]
                %151 = vst [vmem:[%s149] sm:$0xff] %v150
                %v152 = vld [vmem:[%s148 + $0x8] sm:$0xff]
                %153 = vst [vmem:[%s149 + $0x8] sm:$0xff] %v152
                %v154 = vld [vmem:[%s148 + $0x20] sm:$0xff]
                %155 = vst [vmem:[%s149 + $0x10] sm:$0xff] %v154
                %v156 = vld [vmem:[%s148 + $0x28] sm:$0xff]
                %157 = vst [vmem:[%s149 + $0x18] sm:$0xff] %v156
                %v158 = vld [vmem:[%s148 + $0x40] sm:$0xff]
                %159 = vst [vmem:[%s149 + $0x20] sm:$0xff] %v158
                %v160 = vld [vmem:[%s148 + $0x48] sm:$0xff]
                %161 = vst [vmem:[%s149 + $0x28] sm:$0xff] %v160
                %v162 = vld [vmem:[%s148 + $0x60] sm:$0xff]
                %163 = vst [vmem:[%s149 + $0x30] sm:$0xff] %v162
                %v164 = vld [vmem:[%s148 + $0x68] sm:$0xff]
                %165 = vst [vmem:[%s149 + $0x38] sm:$0xff] %v164
                %v166 = vld [vmem:[%s148 + $0x80] sm:$0xff]
                %167 = vst [vmem:[%s149 + $0x40] sm:$0xff] %v166
                %v168 = vld [vmem:[%s148 + $0x88] sm:$0xff]
                %169 = vst [vmem:[%s149 + $0x48] sm:$0xff] %v168
                %v170 = vld [vmem:[%s148 + $0xa0] sm:$0xff]
                %171 = vst [vmem:[%s149 + $0x50] sm:$0xff] %v170
                %v172 = vld [vmem:[%s148 + $0xa8] sm:$0xff]
                %173 = vst [vmem:[%s149 + $0x58] sm:$0xff] %v172
                %v174 = vld [vmem:[%s148 + $0xc0] sm:$0xff]
                %175 = vst [vmem:[%s149 + $0x60] sm:$0xff] %v174
                %v176 = vld [vmem:[%s148 + $0xc8] sm:$0xff]
                %177 = vst [vmem:[%s149 + $0x68] sm:$0xff] %v176
                %v178 = vld [vmem:[%s148 + $0xe0] sm:$0xff]
                %179 = vst [vmem:[%s149 + $0x70] sm:$0xff] %v178
                %v180 = vld [vmem:[%s148 + $0xe8] sm:$0xff]
                %181 = vst [vmem:[%s149 + $0x78] sm:$0xff] %v180
                %v182 = vld [vmem:[%s148 + $0x100] sm:$0xff]
                %183 = vst [vmem:[%s149 + $0x80] sm:$0xff] %v182
                %v184 = vld [vmem:[%s148 + $0x108] sm:$0xff]
                %185 = vst [vmem:[%s149 + $0x88] sm:$0xff] %v184
                %v186 = vld [vmem:[%s148 + $0x120] sm:$0xff]
                %187 = vst [vmem:[%s149 + $0x90] sm:$0xff] %v186
                %v188 = vld [vmem:[%s148 + $0x128] sm:$0xff]
                %189 = vst [vmem:[%s149 + $0x98] sm:$0xff] %v188
                %v190 = vld [vmem:[%s148 + $0x140] sm:$0xff]
                %191 = vst [vmem:[%s149 + $0xa0] sm:$0xff] %v190
                %v192 = vld [vmem:[%s148 + $0x148] sm:$0xff]
                %193 = vst [vmem:[%s149 + $0xa8] sm:$0xff] %v192
                %v194 = vld [vmem:[%s148 + $0x160] sm:$0xff]
                %195 = vst [vmem:[%s149 + $0xb0] sm:$0xff] %v194
                %v196 = vld [vmem:[%s148 + $0x168] sm:$0xff]
                %197 = vst [vmem:[%s149 + $0xb8] sm:$0xff] %v196
                %v198 = vld [vmem:[%s148 + $0x180] sm:$0xff]
                %199 = vst [vmem:[%s149 + $0xc0] sm:$0xff] %v198
                %v200 = vld [vmem:[%s148 + $0x188] sm:$0xff]
                %201 = vst [vmem:[%s149 + $0xc8] sm:$0xff] %v200
                %v202 = vld [vmem:[%s148 + $0x1a0] sm:$0xff]
                %203 = vst [vmem:[%s149 + $0xd0] sm:$0xff] %v202
                %v204 = vld [vmem:[%s148 + $0x1a8] sm:$0xff]
                %205 = vst [vmem:[%s149 + $0xd8] sm:$0xff] %v204
              $region41: #{_lambda_.4} parent=35 // loop_footer
                %s147 = sadd.s32 1, %s143
              $region42: #{_lambda_.4} parent=35 // loop_footer_branch
                %142 = sbr.rel target = $region38
              $region43: #{_lambda_.4} parent=35 // loop_exit
                _
            $region36: #{_lambda_.4} parent=31 // pred_fallthru
              _
            // Predicated region
            $region44: #{_lambda_.4} parent=31 // pred_check
              _
            $region45: #{_lambda_.4} parent=31 // pred_check_branch
              %207 = sbr.rel target = $region47
            $region46: #{_lambda_.4} parent=31 // pred_region
              _
            $region47: #{_lambda_.4} parent=31 // pred_fallthru
              _
          $region32: #{_lambda_.4} parent=27 // pred_fallthru
            _
          %208 = vnop
        $region28: #{_lambda_.4} parent=23 // pred_fallthru
          _
      $region24: #{_lambda_.4} parent=5 // pred_fallthru
        _
      %p209 = scmp.le.s32.totalorder 1, %s9
      %p210 = scmp.lt.s32.totalorder %s9, 3
      %p211 = pnand %p209, %p210
      %p212 = pneg %p211
      // Predicated region
      $region48: #{_lambda_.4} parent=5 // pred_check
        _
      $region49: #{_lambda_.4} parent=5 // pred_check_branch
        %214 = sbr.rel (%p211) target = $region51
      $region50: #{_lambda_.4} parent=5 // pred_region
        %s215 = ssub.s32 %s9, 1
        %s216 = sand.u32 %s43, 1
        %s217 = sand.u32 %s43, 1
        %s218 = smul.addr %s217, 224
        %s219 = scalar_lea.vmem [#allocation2], %s218
        // Predicated region
        $region52: #{_lambda_.4} parent=50 // pred_check
          %p220 = pneg %p56
        $region53: #{_lambda_.4} parent=50 // pred_check_branch
          %222 = sbr.rel (%p220) target = $region55
        $region54: #{_lambda_.4} parent=50 // pred_region
          _
        $region55: #{_lambda_.4} parent=50 // pred_fallthru
          _
        %p223 = pneg %p30
        %p224 = pneg %p27
        %s225 = sand.u32 %s43, 1
        %s226 = sand.u32 %s43, 1
        %s227 = smul.addr %s226, 224
        %s228 = scalar_lea.vmem [#allocation2], %s227
        %p229 = pneg %p56
        %p230 = pneg %p53
        %p231 = pneg %p77
        %p232 = pneg %p74
        %p233 = pneg %p103
        %p234 = pneg %p100
        %s235 = smul.u32 4, %s14
        %p236 = scmp.lt.s32.totalorder %s235, 7
        %s237 = scalar_select %p236, %s235, 7
        %s238 = smul.addr %s237, 8
        %s239 = scalar_lea.vmem %s3, %s238
        %s240 = smul.u32 4, %s14
        %s241 = smul.u32 4, %s14
        %p242 = scmp.lt.s32.totalorder %s241, 7
        %s243 = scalar_select %p242, %s241, 7
        %s244 = smul.addr %s243, 8
        %s245 = scalar_lea.vmem %s3, %s244
        %s246 = smul.u32 4, %s14
        %v248 = vld [vmem:[%s0] sm:$0xf]
        %v249 = vld [vmem:[%s219] sm:$0xff]
        %v250 = vld [vmem:[%s219 + $0x8] sm:$0xff]
        %v251 = vld [vmem:[%s219 + $0x10] sm:$0xff]
        %v252 = vld [vmem:[%s219 + $0x18] sm:$0xff]
        %v253 = vld [vmem:[%s219 + $0x20] sm:$0xff]
        %v254 = vld [vmem:[%s219 + $0x28] sm:$0xff]
        %v255 = vld [vmem:[%s219 + $0x30] sm:$0xff]
        %v256 = vld [vmem:[%s219 + $0x38] sm:$0xff]
        %v257 = vld [vmem:[%s219 + $0x40] sm:$0xff]
        %v258 = vld [vmem:[%s219 + $0x48] sm:$0xff]
        %v259 = vld [vmem:[%s219 + $0x50] sm:$0xff]
        %v260 = vld [vmem:[%s219 + $0x58] sm:$0xff]
        %v261 = vld [vmem:[%s219 + $0x60] sm:$0xff]
        %v262 = vld [vmem:[%s219 + $0x68] sm:$0xff]
        %v263 = vld [vmem:[%s219 + $0x70] sm:$0xff]
        %v264 = vld [vmem:[%s219 + $0x78] sm:$0xff]
        %v265 = vld [vmem:[%s219 + $0x80] sm:$0xff]
        %v266 = vld [vmem:[%s219 + $0x88] sm:$0xff]
        %v267 = vld [vmem:[%s219 + $0x90] sm:$0xff]
        %v268 = vld [vmem:[%s219 + $0x98] sm:$0xff]
        %v269 = vld [vmem:[%s219 + $0xa0] sm:$0xff]
        %v270 = vld [vmem:[%s219 + $0xa8] sm:$0xff]
        %v271 = vld [vmem:[%s219 + $0xb0] sm:$0xff]
        %v272 = vld [vmem:[%s219 + $0xb8] sm:$0xff]
        %v273 = vld [vmem:[%s219 + $0xc0] sm:$0xff]
        %v274 = vld [vmem:[%s219 + $0xc8] sm:$0xff]
        %v275 = vld [vmem:[%s219 + $0xd0] sm:$0x33]
        %v276 = vld [vmem:[%s219 + $0xd8] sm:$0x33]
        %v277 = vld [vmem:[%s2] sm:$0xff]
        %279 = vset.pattern.permute.xlu0 0
        %280 = vperm.xlu0 %279, %v277
        %v281 = vpop.permute.xlu0 %280
        %v311 = vunpack.c.l.b16 %v249
        %v312 = vunpack.c.h.b16 %v249
        %v313 = vunpack.c.l.b16 %v250
        %v314 = vunpack.c.h.b16 %v250
        %v315 = vunpack.c.l.b16 %v251
        %v316 = vunpack.c.h.b16 %v251
        %v317 = vunpack.c.l.b16 %v252
        %v318 = vunpack.c.h.b16 %v252
        %v319 = vunpack.c.l.b16 %v253
        %v320 = vunpack.c.h.b16 %v253
        %v321 = vunpack.c.l.b16 %v254
        %v322 = vunpack.c.h.b16 %v254
        %v323 = vunpack.c.l.b16 %v255
        %v324 = vunpack.c.h.b16 %v255
        %v325 = vunpack.c.l.b16 %v256
        %v326 = vunpack.c.h.b16 %v256
        %v327 = vunpack.c.l.b16 %v257
        %v328 = vunpack.c.h.b16 %v257
        %v329 = vunpack.c.l.b16 %v258
        %v330 = vunpack.c.h.b16 %v258
        %v331 = vunpack.c.l.b16 %v259
        %v332 = vunpack.c.h.b16 %v259
        %v333 = vunpack.c.l.b16 %v260
        %v334 = vunpack.c.h.b16 %v260
        %v335 = vunpack.c.l.b16 %v261
        %v336 = vunpack.c.h.b16 %v261
        %v337 = vunpack.c.l.b16 %v262
        %v338 = vunpack.c.h.b16 %v262
        %v339 = vunpack.c.l.b16 %v263
        %v340 = vunpack.c.h.b16 %v263
        %v341 = vunpack.c.l.b16 %v264
        %v342 = vunpack.c.h.b16 %v264
        %v343 = vunpack.c.l.b16 %v265
        %v344 = vunpack.c.h.b16 %v265
        %v345 = vunpack.c.l.b16 %v266
        %v346 = vunpack.c.h.b16 %v266
        %v347 = vunpack.c.l.b16 %v267
        %v348 = vunpack.c.h.b16 %v267
        %v349 = vunpack.c.l.b16 %v268
        %v350 = vunpack.c.h.b16 %v268
        %v351 = vunpack.c.l.b16 %v269
        %v352 = vunpack.c.h.b16 %v269
        %v353 = vunpack.c.l.b16 %v270
        %v354 = vunpack.c.h.b16 %v270
        %v355 = vunpack.c.l.b16 %v271
        %v356 = vunpack.c.h.b16 %v271
        %v357 = vunpack.c.l.b16 %v272
        %v358 = vunpack.c.h.b16 %v272
        %v359 = vunpack.c.l.b16 %v273
        %v360 = vunpack.c.h.b16 %v273
        %v361 = vunpack.c.l.b16 %v274
        %v362 = vunpack.c.h.b16 %v274
        %v363 = vunpack.c.l.b16 %v275
        %v364 = vunpack.c.h.b16 %v275
        %v365 = vunpack.c.l.b16 %v276
        %v366 = vunpack.c.h.b16 %v276
        %v367 = vpack.c.b16 %v315, %v311
        %v368 = vpack.c.b16 %v316, %v312
        %v369 = vpack.c.b16 %v317, %v313
        %v370 = vpack.c.b16 %v318, %v314
        %v371 = vpack.c.b16 %v323, %v319
        %v372 = vpack.c.b16 %v324, %v320
        %v373 = vpack.c.b16 %v325, %v321
        %v374 = vpack.c.b16 %v326, %v322
        %v375 = vpack.c.b16 %v331, %v327
        %v376 = vpack.c.b16 %v332, %v328
        %v377 = vpack.c.b16 %v333, %v329
        %v378 = vpack.c.b16 %v334, %v330
        %v379 = vpack.c.b16 %v339, %v335
        %v380 = vpack.c.b16 %v340, %v336
        %v381 = vpack.c.b16 %v341, %v337
        %v382 = vpack.c.b16 %v342, %v338
        %v383 = vpack.c.b16 %v347, %v343
        %v384 = vpack.c.b16 %v348, %v344
        %v385 = vpack.c.b16 %v349, %v345
        %v386 = vpack.c.b16 %v350, %v346
        %v387 = vpack.c.b16 %v355, %v351
        %v388 = vpack.c.b16 %v356, %v352
        %v389 = vpack.c.b16 %v357, %v353
        %v390 = vpack.c.b16 %v358, %v354
        %v391 = vpack.c.b16 %v363, %v359
        %v392 = vpack.c.b16 %v364, %v360
        %v393 = vpack.c.b16 %v365, %v361
        %v394 = vpack.c.b16 %v366, %v362
        %vm419 = vcmask 883712
        %v421 = vsel %vm419, %v248, 0
        %vm423 = vcmask 1045504
        %v425 = vsel %vm423, %v391, 0
        %v428 = vsel %vm423, %v392, 0
        %v431 = vsel %vm423, %v393, 0
        %v434 = vsel %vm423, %v394, 0
        %436 = vmatprep.subr.bf16.mxu0 %v368
        %437 = vmatpush1.bf16.msra.mxu0 %v367
        %438 = vmatprep.subr.bf16.mxu0 %v372
        %439 = vmatpush1.bf16.msra.mxu0 %v371
        %440 = vmatprep.subr.bf16.mxu0 %v376
        %441 = vmatpush1.bf16.msra.mxu0 %v375
        %442 = vmatprep.subr.bf16.mxu0 %v380
        %443 = vmatpush1.bf16.msra.mxu0 %v379
        %444 = vmatprep.subr.bf16.mxu0 %v384
        %445 = vmatpush1.bf16.msra.mxu0 %v383
        %446 = vmatprep.subr.bf16.mxu0 %v388
        %447 = vmatpush1.bf16.msra.mxu0 %v387
        %448 = vmatprep.subr.bf16.mxu0 %v428
        %449 = vmatpush1.bf16.msra.mxu0 %v425
        %450 = vmatprep.subr.bf16.mxu0 0
        %451 = vmatpush1.bf16.msra.mxu0 0
        %452 = vmatprep.subr.bf16.mxu0 0
        %453 = vmatpush1.bf16.msra.mxu0 0
        %454 = vmatprep.subr.bf16.mxu0 0
        %455 = vmatpush1.bf16.msra.mxu0 0
        %456 = vmatprep.subr.bf16.mxu0 0
        %457 = vmatpush1.bf16.msra.mxu0 0
        %458 = vmatprep.subr.bf16.mxu0 0
        %459 = vmatpush1.bf16.msra.mxu0 0
        %460 = vmatprep.subr.bf16.mxu0 0
        %461 = vmatpush1.bf16.msra.mxu0 0
        %462 = vmatprep.subr.bf16.mxu0 0
        %463 = vmatpush1.bf16.msra.mxu0 0
        %464 = vmatprep.subr.bf16.mxu0 0
        %465 = vmatpush1.bf16.msra.mxu0 0
        %466 = vmatprep.subr.bf16.mxu0 0
        %467 = vmatpush1.bf16.msra.mxu0 0
        %468 = vmatprep.mubr.bf16.mxu0 0
        %469 = vmatmul.mubr.bf16.gmra.mrb[0].mxu0 %v421
        %v470 = vpop.f32.mrb[0].mxu0
        %v471 = vadd.f32 %v281, %v470
        %v472 = vpop.f32.mrb[0].mxu0
        %v473 = vadd.f32 %v281, %v472
        %v474 = vpop.f32.mrb[0].mxu0
        %v475 = vpop.f32.mrb[0].mxu0
        %476 = vdwg.mxu0
        %477 = vmatprep.subr.bf16.mxu0 %v370
        %478 = vmatpush1.bf16.msra.mxu0 %v369
        %479 = vmatprep.subr.bf16.mxu0 %v374
        %480 = vmatpush1.bf16.msra.mxu0 %v373
        %481 = vmatprep.subr.bf16.mxu0 %v378
        %482 = vmatpush1.bf16.msra.mxu0 %v377
        %483 = vmatprep.subr.bf16.mxu0 %v382
        %484 = vmatpush1.bf16.msra.mxu0 %v381
        %485 = vmatprep.subr.bf16.mxu0 %v386
        %486 = vmatpush1.bf16.msra.mxu0 %v385
        %487 = vmatprep.subr.bf16.mxu0 %v390
        %488 = vmatpush1.bf16.msra.mxu0 %v389
        %489 = vmatprep.subr.bf16.mxu0 %v434
        %490 = vmatpush1.bf16.msra.mxu0 %v431
        %491 = vmatprep.subr.bf16.mxu0 0
        %492 = vmatpush1.bf16.msra.mxu0 0
        %493 = vmatprep.subr.bf16.mxu0 0
        %494 = vmatpush1.bf16.msra.mxu0 0
        %495 = vmatprep.subr.bf16.mxu0 0
        %496 = vmatpush1.bf16.msra.mxu0 0
        %497 = vmatprep.subr.bf16.mxu0 0
        %498 = vmatpush1.bf16.msra.mxu0 0
        %499 = vmatprep.subr.bf16.mxu0 0
        %500 = vmatpush1.bf16.msra.mxu0 0
        %501 = vmatprep.subr.bf16.mxu0 0
        %502 = vmatpush1.bf16.msra.mxu0 0
        %503 = vmatprep.subr.bf16.mxu0 0
        %504 = vmatpush1.bf16.msra.mxu0 0
        %505 = vmatprep.subr.bf16.mxu0 0
        %506 = vmatpush1.bf16.msra.mxu0 0
        %507 = vmatprep.subr.bf16.mxu0 0
        %508 = vmatpush1.bf16.msra.mxu0 0
        %509 = vmatprep.mubr.bf16.mxu0 0
        %510 = vmatmul.mubr.bf16.gmra.mrb[0].mxu0 %v421
        %v511 = vpop.f32.mrb[0].mxu0
        %v512 = vadd.f32 %v281, %v511
        %v513 = vpop.f32.mrb[0].mxu0
        %v514 = vadd.f32 %v281, %v513
        %v515 = vpop.f32.mrb[0].mxu0
        %v516 = vpop.f32.mrb[0].mxu0
        %517 = vdwg.mxu0
        %518 = vst [vmem:[%s245] sm:$0xff] %v471
        %519 = vst [vmem:[%s245 + $0x8] sm:$0xff] %v473
        %520 = vst [vmem:[%s245 + $0x10] sm:$0xff] %v512
        %521 = vst [vmem:[%s245 + $0x18] sm:$0xff] %v514
        %s522 = smul.u32 4, %s14
        %p523 = scmp.lt.s32.totalorder %s522, 7
        %s524 = scalar_select %p523, %s522, 7
        %s525 = smul.addr %s524, 8
        %s526 = scalar_lea.vmem %s3, %s525
        // Predicated region
        $region56: #{_lambda_.4} parent=50 // pred_check
          %p527 = pneg %p100
        $region57: #{_lambda_.4} parent=50 // pred_check_branch
          %529 = sbr.rel (%p527) target = $region59
        $region58: #{_lambda_.4} parent=50 // pred_region
          %s530 = smul.u32 4, %s14
        $region59: #{_lambda_.4} parent=50 // pred_fallthru
          _
      $region51: #{_lambda_.4} parent=5 // pred_fallthru
        _
      %p531 = scmp.le.s32.totalorder 2, %s9
      // Predicated region
      $region60: #{_lambda_.4} parent=5 // pred_check
        %p532 = pneg %p531
      $region61: #{_lambda_.4} parent=5 // pred_check_branch
        %534 = sbr.rel (%p532) target = $region63
      $region62: #{_lambda_.4} parent=5 // pred_region
        %s535 = ssub.s32 %s9, 2
        // Predicated region
        $region64: #{_lambda_.4} parent=62 // pred_check
          %p536 = pneg %p106
        $region65: #{_lambda_.4} parent=62 // pred_check_branch
          %538 = sbr.rel (%p536) target = $region67
        $region66: #{_lambda_.4} parent=62 // pred_region
          %s539 = smul.u32 4, %s15
          %p540 = scmp.lt.s32.totalorder %s539, 7
          %s541 = scalar_select %p540, %s539, 7
          %s542 = smul.addr %s541, 8
          %s543 = scalar_lea.vmem %s3, %s542
        $region67: #{_lambda_.4} parent=62 // pred_fallthru
          _
      $region63: #{_lambda_.4} parent=5 // pred_fallthru
        _
    $region6: #{_lambda_.4} parent=1 // loop_footer
      %s13 = sadd.s32 1, %s9
    $region7: #{_lambda_.4} parent=1 // loop_footer_branch
      %8 = sbr.rel target = $region3
    $region8: #{_lambda_.4} parent=1 // loop_exit
      _

// kernel: _lambda_.5
$region0: #{_lambda_.5}
  #allocation0 [shape = 'u32[]', space=smem, size = 0x4, offset = 0x4, fixed_abs, tag = 'smem constant byte address 0x4 - core index']
  #allocation1 [shape = 'u32[144,128]{1,0:T(1,128)}', space=vmem, size = 0x12000, scoped, tag = 'internal scratch']
  %s0 = inlined_call_operand.vmem [shape: f32[8,1024], index: 0, kind: input, shape index: {}]
  %s1 = inlined_call_operand.vmem [shape: f32[8,1], index: 1, kind: input, shape index: {}]
  %s2 = inlined_call_operand.vmem [shape: f32[8,1], index: 2, kind: input, shape index: {}]
  %s3 = inlined_call_operand.vmem [shape: f32[8,1024], index: 3, kind: output, shape index: {}]
  %s4 = sld [smem:[#allocation0]]
  $region45: #{_lambda_.5} parent=0
    _
  %s6 = ssub.s32 1, %s4
  %s7 = scalar_select 0, %s6, %s4
  loop: start=0, step=1, limit=4
  $region2: #{_lambda_.5} parent=0 // loop_pre_header
    _
  $region3: #{_lambda_.5} parent=0 // loop_header
    %s9 = sphi 0, %s13
    %p10 = scmp.ge.s32.totalorder %s9, 4
    %s19 = sphi 0, %s21
    %s22 = sphi 0, %s19
    %s23 = sphi 0, %s22
    %s39 = sphi 0, %s23
    %s43 = sphi 0, %s43
    %s45 = sphi 0, %s43
    %s46 = sphi 0, %s45
    %s60 = sphi 0, %s46
    %s64 = sphi 0, %s64
    %s66 = sphi 0, %s64
    %s67 = sphi 0, %s66
    %s81 = sphi 0, %s67
    %s87 = sphi 0, %s89
    %s90 = sphi 0, %s87
    %s91 = sphi 0, %s90
    %s107 = sphi 0, %s91
  $region4: #{_lambda_.5} parent=0 // loop_header_branch
    %12 = sbr.rel (%p10) target = $region8
  $region5: #{_lambda_.5} parent=0 // loop_body
    %s14 = ssub.s32 %s9, 1
    %s15 = ssub.s32 %s9, 2
    %s16 = sadd.s32 %s9, 1
    %s17 = ssub.s32 %s9, %s16
    %p18 = scmp.eq.s32.totalorder %s17, 0
    %s20 = sadd.s32 %s19, 1
    %s21 = scalar_select %p18, %s19, %s20
    %p24 = pneg %p18
    %p25 = scmp.eq.s32.totalorder %s9, 1
    %p26 = por %p24, %p25
    %p27 = scmp.ne.s32.totalorder %s19, %s22
    %p28 = scmp.eq.s32.totalorder %s9, 0
    %p29 = por %p27, %p28
    %p30 = scmp.ne.s32.totalorder %s19, %s22
    %p31 = scmp.eq.s32.totalorder %s14, 1
    %p32 = por %p30, %p31
    %p33 = scmp.ne.s32.totalorder %s22, %s23
    %p34 = scmp.eq.s32.totalorder %s14, 0
    %p35 = por %p33, %p34
    %p36 = scmp.ne.s32.totalorder %s22, %s23
    %p37 = scmp.eq.s32.totalorder %s15, 1
    %p38 = por %p36, %p37
    %p40 = scmp.ne.s32.totalorder %s23, %s39
    %p41 = scmp.eq.s32.totalorder %s15, 0
    %p42 = por %p40, %p41
    %s44 = sadd.s32 %s43, 1
    %p47 = scmp.eq.s32.totalorder %s9, 1
    %p48 = scmp.ne.s32.totalorder %s43, %s45
    %p49 = scmp.eq.s32.totalorder %s9, 0
    %p50 = por %p48, %p49
    %p51 = scmp.ne.s32.totalorder %s43, %s45
    %p52 = scmp.eq.s32.totalorder %s14, 1
    %p53 = por %p51, %p52
    %p54 = scmp.ne.s32.totalorder %s45, %s46
    %p55 = scmp.eq.s32.totalorder %s14, 0
    %p56 = por %p54, %p55
    %p57 = scmp.ne.s32.totalorder %s45, %s46
    %p58 = scmp.eq.s32.totalorder %s15, 1
    %p59 = por %p57, %p58
    %p61 = scmp.ne.s32.totalorder %s46, %s60
    %p62 = scmp.eq.s32.totalorder %s15, 0
    %p63 = por %p61, %p62
    %s65 = sadd.s32 %s64, 1
    %p68 = scmp.eq.s32.totalorder %s9, 1
    %p69 = scmp.ne.s32.totalorder %s64, %s66
    %p70 = scmp.eq.s32.totalorder %s9, 0
    %p71 = por %p69, %p70
    %p72 = scmp.ne.s32.totalorder %s64, %s66
    %p73 = scmp.eq.s32.totalorder %s14, 1
    %p74 = por %p72, %p73
    %p75 = scmp.ne.s32.totalorder %s66, %s67
    %p76 = scmp.eq.s32.totalorder %s14, 0
    %p77 = por %p75, %p76
    %p78 = scmp.ne.s32.totalorder %s66, %s67
    %p79 = scmp.eq.s32.totalorder %s15, 1
    %p80 = por %p78, %p79
    %p82 = scmp.ne.s32.totalorder %s67, %s81
    %p83 = scmp.eq.s32.totalorder %s15, 0
    %p84 = por %p82, %p83
    %s85 = ssub.s32 %s9, %s16
    %p86 = scmp.eq.s32.totalorder %s85, 0
    %s88 = sadd.s32 %s87, 1
    %s89 = scalar_select %p86, %s87, %s88
    %p92 = pneg %p86
    %p93 = scmp.eq.s32.totalorder %s9, 1
    %p94 = por %p92, %p93
    %p95 = scmp.ne.s32.totalorder %s87, %s90
    %p96 = scmp.eq.s32.totalorder %s9, 0
    %p97 = por %p95, %p96
    %p98 = scmp.ne.s32.totalorder %s87, %s90
    %p99 = scmp.eq.s32.totalorder %s14, 1
    %p100 = por %p98, %p99
    %p101 = scmp.ne.s32.totalorder %s90, %s91
    %p102 = scmp.eq.s32.totalorder %s14, 0
    %p103 = por %p101, %p102
    %p104 = scmp.ne.s32.totalorder %s90, %s91
    %p105 = scmp.eq.s32.totalorder %s15, 1
    %p106 = por %p104, %p105
    %p108 = scmp.ne.s32.totalorder %s91, %s107
    %p109 = scmp.eq.s32.totalorder %s15, 0
    %p110 = por %p108, %p109
    %p111 = scmp.le.s32.totalorder 1, %s9
    %p112 = scmp.lt.s32.totalorder %s9, 3
    %p113 = pnand %p111, %p112
    %p114 = pneg %p113
    // Predicated region
    $region9: #{_lambda_.5} parent=5 // pred_check
      _
    $region10: #{_lambda_.5} parent=5 // pred_check_branch
      %116 = sbr.rel (%p113) target = $region12
    $region11: #{_lambda_.5} parent=5 // pred_region
      %s117 = ssub.s32 %s9, 1
      // Predicated region
      $region13: #{_lambda_.5} parent=11 // pred_check
        %p118 = pneg %p56
      $region14: #{_lambda_.5} parent=11 // pred_check_branch
        %120 = sbr.rel (%p118) target = $region16
      $region15: #{_lambda_.5} parent=11 // pred_region
        _
      $region16: #{_lambda_.5} parent=11 // pred_fallthru
        _
      // Predicated region
      $region17: #{_lambda_.5} parent=11 // pred_check
        %p121 = pneg %p77
      $region18: #{_lambda_.5} parent=11 // pred_check_branch
        %123 = sbr.rel (%p121) target = $region20
      $region19: #{_lambda_.5} parent=11 // pred_region
        _
      $region20: #{_lambda_.5} parent=11 // pred_fallthru
        _
    $region12: #{_lambda_.5} parent=5 // pred_fallthru
      _
    %p124 = scmp.lt.s32.totalorder %s9, 2
    // Predicated region
    $region21: #{_lambda_.5} parent=5 // pred_check
      %p125 = pneg %p124
    $region22: #{_lambda_.5} parent=5 // pred_check_branch
      %127 = sbr.rel (%p125) target = $region24
    $region23: #{_lambda_.5} parent=5 // pred_region
      // Predicated region
      $region25: #{_lambda_.5} parent=23 // pred_check
        %p128 = pneg %p29
      $region26: #{_lambda_.5} parent=23 // pred_check_branch
        %130 = sbr.rel (%p128) target = $region28
      $region27: #{_lambda_.5} parent=23 // pred_region
        %s131 = smul.u32 4, %s9
        %p132 = scmp.lt.s32.totalorder %s131, 7
        %s133 = scalar_select %p132, %s131, 7
        %s134 = smul.addr %s133, 8
        %s135 = scalar_lea.vmem %s0, %s134
        %s136 = smul.u32 4, %s9
      $region28: #{_lambda_.5} parent=23 // pred_fallthru
        _
    $region24: #{_lambda_.5} parent=5 // pred_fallthru
      _
    %p137 = scmp.le.s32.totalorder 1, %s9
    %p138 = scmp.lt.s32.totalorder %s9, 3
    %p139 = pnand %p137, %p138
    %p140 = pneg %p139
    // Predicated region
    $region29: #{_lambda_.5} parent=5 // pred_check
      _
    $region30: #{_lambda_.5} parent=5 // pred_check_branch
      %142 = sbr.rel (%p139) target = $region32
    $region31: #{_lambda_.5} parent=5 // pred_region
      %s143 = ssub.s32 %s9, 1
      %s144 = smul.u32 4, %s14
      %p145 = scmp.lt.s32.totalorder %s144, 7
      %s146 = scalar_select %p145, %s144, 7
      %s147 = smul.addr %s146, 8
      %s148 = scalar_lea.vmem %s0, %s147
      %p149 = pneg %p35
      %p150 = pneg %p32
      %p151 = pneg %p56
      %p152 = pneg %p53
      %p153 = pneg %p77
      %p154 = pneg %p74
      %p155 = pneg %p103
      %p156 = pneg %p100
      %s157 = smul.u32 4, %s14
      %p158 = scmp.lt.s32.totalorder %s157, 7
      %s159 = scalar_select %p158, %s157, 7
      %s160 = smul.addr %s159, 8
      %s161 = scalar_lea.vmem %s3, %s160
      %s162 = smul.u32 4, %s14
      %p163 = scmp.lt.s32.totalorder %s162, 7
      %s164 = scalar_select %p163, %s162, 7
      %s165 = smul.addr %s164, 8
      %s166 = scalar_lea.vmem %s0, %s165
      %s167 = smul.u32 4, %s14
      %s168 = smul.u32 4, %s14
      %p169 = scmp.lt.s32.totalorder %s168, 7
      %s170 = scalar_select %p169, %s168, 7
      %s171 = smul.addr %s170, 8
      %s172 = scalar_lea.vmem %s3, %s171
      %s173 = smul.u32 4, %s14
      %v174 = vld [vmem:[%s166] sm:$0xff]
      %v175 = vld [vmem:[%s166 + $0x8] sm:$0xff]
      %v176 = vld [vmem:[%s166 + $0x10] sm:$0xff]
      %v177 = vld [vmem:[%s166 + $0x18] sm:$0xff]
      %v178 = vadd.f32 %v174, %v175
      %v179 = vadd.f32 %v178, %v176
      %v180 = vadd.f32 %v179, %v177
      %181 = vadd.xlane.f32.xlu0 %v180
      %v182 = vpop.xlane.xlu0 %181
      %v183 = vadd.f32 %v182, 0.0
      %v184 = vrcp.pop 512.0
      %v185 = vmul.f32 %v183, %v184
      %v186 = vsub.f32 %v174, %v185
      %v187 = vsub.f32 %v175, %v185
      %v188 = vsub.f32 %v176, %v185
      %v189 = vsub.f32 %v177, %v185
      %v190 = vmul.f32 %v186, %v186
      %v191 = vmul.f32 %v187, %v187
      %v192 = vmul.f32 %v188, %v188
      %v193 = vmul.f32 %v189, %v189
      %v194 = vadd.f32 %v190, %v191
      %v195 = vadd.f32 %v194, %v192
      %v196 = vadd.f32 %v195, %v193
      %197 = vadd.xlane.f32.xlu0 %v196
      %v198 = vpop.xlane.xlu0 %197
      %v199 = vadd.f32 %v198, 0.0
      %v200 = vmul.f32 %v199, %v184
      %v201 = vadd.f32 %v200, 1e-05
      %v202 = vrsqrt.pop %v201
      %v203 = vmul.f32 %v186, %v202
      %v204 = vmul.f32 %v187, %v202
      %v205 = vmul.f32 %v188, %v202
      %v206 = vmul.f32 %v189, %v202
      %v207 = vld [vmem:[%s1] sm:$0xff]
      %209 = vset.pattern.permute.xlu0 0
      %210 = vperm.xlu0 %209, %v207
      %v211 = vpop.permute.xlu0 %210
      %v213 = vmul.f32 %v203, %v211
      %v214 = vmul.f32 %v204, %v211
      %v215 = vmul.f32 %v205, %v211
      %v216 = vmul.f32 %v206, %v211
      %v217 = vld [vmem:[%s2] sm:$0xff]
      %219 = vset.pattern.permute.xlu0 0
      %220 = vperm.xlu0 %219, %v217
      %v221 = vpop.permute.xlu0 %220
      %v223 = vadd.f32 %v213, %v221
      %v224 = vadd.f32 %v214, %v221
      %v225 = vadd.f32 %v215, %v221
      %v226 = vadd.f32 %v216, %v221
      %vm227 = vcmp.ge.f32.partialorder %v223, 0.0
      %vm228 = vcmp.ge.f32.partialorder %v224, 0.0
      %vm229 = vcmp.ge.f32.partialorder %v225, 0.0
      %vm230 = vcmp.ge.f32.partialorder %v226, 0.0
      %v231 = vmul.f32 %v223, 0.01
      %v232 = vmul.f32 %v224, 0.01
      %v233 = vmul.f32 %v225, 0.01
      %v234 = vmul.f32 %v226, 0.01
      %v235 = vsel %vm227, %v223, %v231
      %v236 = vsel %vm228, %v224, %v232
      %v237 = vsel %vm229, %v225, %v233
      %v238 = vsel %vm230, %v226, %v234
      %239 = vst [vmem:[%s172] sm:$0xff] %v235
      %240 = vst [vmem:[%s172 + $0x8] sm:$0xff] %v236
      %241 = vst [vmem:[%s172 + $0x10] sm:$0xff] %v237
      %242 = vst [vmem:[%s172 + $0x18] sm:$0xff] %v238
      %s243 = smul.u32 4, %s14
      %p244 = scmp.lt.s32.totalorder %s243, 7
      %s245 = scalar_select %p244, %s243, 7
      %s246 = smul.addr %s245, 8
      %s247 = scalar_lea.vmem %s3, %s246
      // Predicated region
      $region33: #{_lambda_.5} parent=31 // pred_check
        %p248 = pneg %p100
      $region34: #{_lambda_.5} parent=31 // pred_check_branch
        %250 = sbr.rel (%p248) target = $region36
      $region35: #{_lambda_.5} parent=31 // pred_region
        %s251 = smul.u32 4, %s14
      $region36: #{_lambda_.5} parent=31 // pred_fallthru
        _
    $region32: #{_lambda_.5} parent=5 // pred_fallthru
      _
    %p252 = scmp.le.s32.totalorder 2, %s9
    // Predicated region
    $region37: #{_lambda_.5} parent=5 // pred_check
      %p253 = pneg %p252
    $region38: #{_lambda_.5} parent=5 // pred_check_branch
      %255 = sbr.rel (%p253) target = $region40
    $region39: #{_lambda_.5} parent=5 // pred_region
      %s256 = ssub.s32 %s9, 2
      // Predicated region
      $region41: #{_lambda_.5} parent=39 // pred_check
        %p257 = pneg %p106
      $region42: #{_lambda_.5} parent=39 // pred_check_branch
        %259 = sbr.rel (%p257) target = $region44
      $region43: #{_lambda_.5} parent=39 // pred_region
        %s260 = smul.u32 4, %s15
        %p261 = scmp.lt.s32.totalorder %s260, 7
        %s262 = scalar_select %p261, %s260, 7
        %s263 = smul.addr %s262, 8
        %s264 = scalar_lea.vmem %s3, %s263
      $region44: #{_lambda_.5} parent=39 // pred_fallthru
        _
    $region40: #{_lambda_.5} parent=5 // pred_fallthru
      _
  $region6: #{_lambda_.5} parent=0 // loop_footer
    %s13 = sadd.s32 1, %s9
  $region7: #{_lambda_.5} parent=0 // loop_footer_branch
    %8 = sbr.rel target = $region3
  $region8: #{_lambda_.5} parent=0 // loop_exit
    _

// kernel: _lambda_.6
$region0: #{_lambda_.6}
  #allocation0 [shape = 'u32[]', space=smem, size = 0x4, offset = 0x4, fixed_abs, tag = 'smem constant byte address 0x4 - core index']
  #allocation1 [shape = 'u32[144,128]{1,0:T(1,128)}', space=vmem, size = 0x12000, scoped, tag = 'internal scratch']
  %s0 = inlined_call_operand.vmem [shape: bf16[8,216], index: 0, kind: input, shape index: {}]
  %s1 = inlined_call_operand.vmem [shape: bf16[216,1024], index: 1, kind: input, shape index: {}]
  %s2 = inlined_call_operand.vmem [shape: f32[8,1], index: 2, kind: input, shape index: {}]
  %s3 = inlined_call_operand.vmem [shape: f32[8,1024], index: 3, kind: output, shape index: {}]
  %s4 = sld [smem:[#allocation0]]
  $region68: #{_lambda_.6} parent=0
    _
  %s6 = ssub.s32 1, %s4
  %s7 = scalar_select 0, %s6, %s4
  $region1: #{_lambda_.6} parent=0
    #allocation2 [shape = 'u8[442368]{0}', space=vmem, size = 0x6c000, scoped, tag = 'input window, operand 1']
    loop: start=0, step=1, limit=4
    $region2: #{_lambda_.6} parent=1 // loop_pre_header
      _
    $region3: #{_lambda_.6} parent=1 // loop_header
      %s9 = sphi 0, %s13
      %p10 = scmp.ge.s32.totalorder %s9, 4
      %s17 = sphi 0, %s17
      %s19 = sphi 0, %s17
      %s20 = sphi 0, %s19
      %s34 = sphi 0, %s20
      %s40 = sphi 0, %s42
      %s43 = sphi 0, %s40
      %s44 = sphi 0, %s43
      %s60 = sphi 0, %s44
      %s64 = sphi 0, %s64
      %s66 = sphi 0, %s64
      %s67 = sphi 0, %s66
      %s81 = sphi 0, %s67
      %s87 = sphi 0, %s89
      %s90 = sphi 0, %s87
      %s91 = sphi 0, %s90
      %s107 = sphi 0, %s91
    $region4: #{_lambda_.6} parent=1 // loop_header_branch
      %12 = sbr.rel (%p10) target = $region8
    $region5: #{_lambda_.6} parent=1 // loop_body
      %s14 = ssub.s32 %s9, 1
      %s15 = ssub.s32 %s9, 2
      %s16 = sadd.s32 %s9, 1
      %s18 = sadd.s32 %s17, 1
      %p21 = scmp.eq.s32.totalorder %s9, 1
      %p22 = scmp.ne.s32.totalorder %s17, %s19
      %p23 = scmp.eq.s32.totalorder %s9, 0
      %p24 = por %p22, %p23
      %p25 = scmp.ne.s32.totalorder %s17, %s19
      %p26 = scmp.eq.s32.totalorder %s14, 1
      %p27 = por %p25, %p26
      %p28 = scmp.ne.s32.totalorder %s19, %s20
      %p29 = scmp.eq.s32.totalorder %s14, 0
      %p30 = por %p28, %p29
      %p31 = scmp.ne.s32.totalorder %s19, %s20
      %p32 = scmp.eq.s32.totalorder %s15, 1
      %p33 = por %p31, %p32
      %p35 = scmp.ne.s32.totalorder %s20, %s34
      %p36 = scmp.eq.s32.totalorder %s15, 0
      %p37 = por %p35, %p36
      %s38 = ssub.s32 %s9, %s16
      %p39 = scmp.eq.s32.totalorder %s38, 0
      %s41 = sadd.s32 %s40, 1
      %s42 = scalar_select %p39, %s40, %s41
      %p45 = pneg %p39
      %p46 = scmp.eq.s32.totalorder %s9, 1
      %p47 = por %p45, %p46
      %p48 = scmp.ne.s32.totalorder %s40, %s43
      %p49 = scmp.eq.s32.totalorder %s9, 0
      %p50 = por %p48, %p49
      %p51 = scmp.ne.s32.totalorder %s40, %s43
      %p52 = scmp.eq.s32.totalorder %s14, 1
      %p53 = por %p51, %p52
      %p54 = scmp.ne.s32.totalorder %s43, %s44
      %p55 = scmp.eq.s32.totalorder %s14, 0
      %p56 = por %p54, %p55
      %p57 = scmp.ne.s32.totalorder %s43, %s44
      %p58 = scmp.eq.s32.totalorder %s15, 1
      %p59 = por %p57, %p58
      %p61 = scmp.ne.s32.totalorder %s44, %s60
      %p62 = scmp.eq.s32.totalorder %s15, 0
      %p63 = por %p61, %p62
      %s65 = sadd.s32 %s64, 1
      %p68 = scmp.eq.s32.totalorder %s9, 1
      %p69 = scmp.ne.s32.totalorder %s64, %s66
      %p70 = scmp.eq.s32.totalorder %s9, 0
      %p71 = por %p69, %p70
      %p72 = scmp.ne.s32.totalorder %s64, %s66
      %p73 = scmp.eq.s32.totalorder %s14, 1
      %p74 = por %p72, %p73
      %p75 = scmp.ne.s32.totalorder %s66, %s67
      %p76 = scmp.eq.s32.totalorder %s14, 0
      %p77 = por %p75, %p76
      %p78 = scmp.ne.s32.totalorder %s66, %s67
      %p79 = scmp.eq.s32.totalorder %s15, 1
      %p80 = por %p78, %p79
      %p82 = scmp.ne.s32.totalorder %s67, %s81
      %p83 = scmp.eq.s32.totalorder %s15, 0
      %p84 = por %p82, %p83
      %s85 = ssub.s32 %s9, %s16
      %p86 = scmp.eq.s32.totalorder %s85, 0
      %s88 = sadd.s32 %s87, 1
      %s89 = scalar_select %p86, %s87, %s88
      %p92 = pneg %p86
      %p93 = scmp.eq.s32.totalorder %s9, 1
      %p94 = por %p92, %p93
      %p95 = scmp.ne.s32.totalorder %s87, %s90
      %p96 = scmp.eq.s32.totalorder %s9, 0
      %p97 = por %p95, %p96
      %p98 = scmp.ne.s32.totalorder %s87, %s90
      %p99 = scmp.eq.s32.totalorder %s14, 1
      %p100 = por %p98, %p99
      %p101 = scmp.ne.s32.totalorder %s90, %s91
      %p102 = scmp.eq.s32.totalorder %s14, 0
      %p103 = por %p101, %p102
      %p104 = scmp.ne.s32.totalorder %s90, %s91
      %p105 = scmp.eq.s32.totalorder %s15, 1
      %p106 = por %p104, %p105
      %p108 = scmp.ne.s32.totalorder %s91, %s107
      %p109 = scmp.eq.s32.totalorder %s15, 0
      %p110 = por %p108, %p109
      %p111 = scmp.le.s32.totalorder 1, %s9
      %p112 = scmp.lt.s32.totalorder %s9, 3
      %p113 = pnand %p111, %p112
      %p114 = pneg %p113
      // Predicated region
      $region9: #{_lambda_.6} parent=5 // pred_check
        _
      $region10: #{_lambda_.6} parent=5 // pred_check_branch
        %116 = sbr.rel (%p113) target = $region12
      $region11: #{_lambda_.6} parent=5 // pred_region
        %s117 = ssub.s32 %s9, 1
        // Predicated region
        $region13: #{_lambda_.6} parent=11 // pred_check
          %p118 = pneg %p30
        $region14: #{_lambda_.6} parent=11 // pred_check_branch
          %120 = sbr.rel (%p118) target = $region16
        $region15: #{_lambda_.6} parent=11 // pred_region
          _
        $region16: #{_lambda_.6} parent=11 // pred_fallthru
          _
        // Predicated region
        $region17: #{_lambda_.6} parent=11 // pred_check
          %p121 = pneg %p77
        $region18: #{_lambda_.6} parent=11 // pred_check_branch
          %123 = sbr.rel (%p121) target = $region20
        $region19: #{_lambda_.6} parent=11 // pred_region
          _
        $region20: #{_lambda_.6} parent=11 // pred_fallthru
          _
      $region12: #{_lambda_.6} parent=5 // pred_fallthru
        _
      %p124 = scmp.lt.s32.totalorder %s9, 2
      // Predicated region
      $region21: #{_lambda_.6} parent=5 // pred_check
        %p125 = pneg %p124
      $region22: #{_lambda_.6} parent=5 // pred_check_branch
        %127 = sbr.rel (%p125) target = $region24
      $region23: #{_lambda_.6} parent=5 // pred_region
        // Predicated region
        $region25: #{_lambda_.6} parent=23 // pred_check
          %p128 = pneg %p50
        $region26: #{_lambda_.6} parent=23 // pred_check_branch
          %130 = sbr.rel (%p128) target = $region28
        $region27: #{_lambda_.6} parent=23 // pred_region
          %s131 = sand.u32 %s40, 1
          %s132 = sand.u32 %s40, 1
          %s133 = smul.addr %s132, 432
          %s134 = scalar_lea.vmem [#allocation2], %s133
          %s135 = smul.u32 4, %s9
          %s136 = smul.addr %s135, 4
          %s137 = scalar_lea.vmem %s1, %s136
          // Predicated region
          $region29: #{_lambda_.6} parent=27 // pred_check
            _
          $region30: #{_lambda_.6} parent=27 // pred_check_branch
            %139 = sbr.rel (0) target = $region32
          $region31: #{_lambda_.6} parent=27 // pred_region
            // Predicated region
            $region33: #{_lambda_.6} parent=31 // pred_check
              _
            $region34: #{_lambda_.6} parent=31 // pred_check_branch
              %141 = sbr.rel (0) target = $region36
            $region35: #{_lambda_.6} parent=31 // pred_region
              loop: start=0, step=1, limit=1
              $region37: #{_lambda_.6} parent=35 // loop_pre_header
                _
              $region38: #{_lambda_.6} parent=35 // loop_header
                %s143 = sphi 0, %s147
                %p144 = scmp.ge.s32.totalorder %s143, 1
                %s148 = sphi %s137, %s137
                %s149 = sphi %s134, %s134
              $region39: #{_lambda_.6} parent=35 // loop_header_branch
                %146 = sbr.rel (%p144) target = $region43
              $region40: #{_lambda_.6} parent=35 // loop_body
                %v150 = vld [vmem:[%s148] sm:$0xff]
                %151 = vst [vmem:[%s149] sm:$0xff] %v150
                %v152 = vld [vmem:[%s148 + $0x8] sm:$0xff]
                %153 = vst [vmem:[%s149 + $0x8] sm:$0xff] %v152
                %v154 = vld [vmem:[%s148 + $0x20] sm:$0xff]
                %155 = vst [vmem:[%s149 + $0x10] sm:$0xff] %v154
                %v156 = vld [vmem:[%s148 + $0x28] sm:$0xff]
                %157 = vst [vmem:[%s149 + $0x18] sm:$0xff] %v156
                %v158 = vld [vmem:[%s148 + $0x40] sm:$0xff]
                %159 = vst [vmem:[%s149 + $0x20] sm:$0xff] %v158
                %v160 = vld [vmem:[%s148 + $0x48] sm:$0xff]
                %161 = vst [vmem:[%s149 + $0x28] sm:$0xff] %v160
                %v162 = vld [vmem:[%s148 + $0x60] sm:$0xff]
                %163 = vst [vmem:[%s149 + $0x30] sm:$0xff] %v162
                %v164 = vld [vmem:[%s148 + $0x68] sm:$0xff]
                %165 = vst [vmem:[%s149 + $0x38] sm:$0xff] %v164
                %v166 = vld [vmem:[%s148 + $0x80] sm:$0xff]
                %167 = vst [vmem:[%s149 + $0x40] sm:$0xff] %v166
                %v168 = vld [vmem:[%s148 + $0x88] sm:$0xff]
                %169 = vst [vmem:[%s149 + $0x48] sm:$0xff] %v168
                %v170 = vld [vmem:[%s148 + $0xa0] sm:$0xff]
                %171 = vst [vmem:[%s149 + $0x50] sm:$0xff] %v170
                %v172 = vld [vmem:[%s148 + $0xa8] sm:$0xff]
                %173 = vst [vmem:[%s149 + $0x58] sm:$0xff] %v172
                %v174 = vld [vmem:[%s148 + $0xc0] sm:$0xff]
                %175 = vst [vmem:[%s149 + $0x60] sm:$0xff] %v174
                %v176 = vld [vmem:[%s148 + $0xc8] sm:$0xff]
                %177 = vst [vmem:[%s149 + $0x68] sm:$0xff] %v176
                %v178 = vld [vmem:[%s148 + $0xe0] sm:$0xff]
                %179 = vst [vmem:[%s149 + $0x70] sm:$0xff] %v178
                %v180 = vld [vmem:[%s148 + $0xe8] sm:$0xff]
                %181 = vst [vmem:[%s149 + $0x78] sm:$0xff] %v180
                %v182 = vld [vmem:[%s148 + $0x100] sm:$0xff]
                %183 = vst [vmem:[%s149 + $0x80] sm:$0xff] %v182
                %v184 = vld [vmem:[%s148 + $0x108] sm:$0xff]
                %185 = vst [vmem:[%s149 + $0x88] sm:$0xff] %v184
                %v186 = vld [vmem:[%s148 + $0x120] sm:$0xff]
                %187 = vst [vmem:[%s149 + $0x90] sm:$0xff] %v186
                %v188 = vld [vmem:[%s148 + $0x128] sm:$0xff]
                %189 = vst [vmem:[%s149 + $0x98] sm:$0xff] %v188
                %v190 = vld [vmem:[%s148 + $0x140] sm:$0xff]
                %191 = vst [vmem:[%s149 + $0xa0] sm:$0xff] %v190
                %v192 = vld [vmem:[%s148 + $0x148] sm:$0xff]
                %193 = vst [vmem:[%s149 + $0xa8] sm:$0xff] %v192
                %v194 = vld [vmem:[%s148 + $0x160] sm:$0xff]
                %195 = vst [vmem:[%s149 + $0xb0] sm:$0xff] %v194
                %v196 = vld [vmem:[%s148 + $0x168] sm:$0xff]
                %197 = vst [vmem:[%s149 + $0xb8] sm:$0xff] %v196
                %v198 = vld [vmem:[%s148 + $0x180] sm:$0xff]
                %199 = vst [vmem:[%s149 + $0xc0] sm:$0xff] %v198
                %v200 = vld [vmem:[%s148 + $0x188] sm:$0xff]
                %201 = vst [vmem:[%s149 + $0xc8] sm:$0xff] %v200
                %v202 = vld [vmem:[%s148 + $0x1a0] sm:$0xff]
                %203 = vst [vmem:[%s149 + $0xd0] sm:$0xff] %v202
                %v204 = vld [vmem:[%s148 + $0x1a8] sm:$0xff]
                %205 = vst [vmem:[%s149 + $0xd8] sm:$0xff] %v204
                %v206 = vld [vmem:[%s148 + $0x1c0] sm:$0xff]
                %207 = vst [vmem:[%s149 + $0xe0] sm:$0xff] %v206
                %v208 = vld [vmem:[%s148 + $0x1c8] sm:$0xff]
                %209 = vst [vmem:[%s149 + $0xe8] sm:$0xff] %v208
                %v210 = vld [vmem:[%s148 + $0x1e0] sm:$0xff]
                %211 = vst [vmem:[%s149 + $0xf0] sm:$0xff] %v210
                %v212 = vld [vmem:[%s148 + $0x1e8] sm:$0xff]
                %213 = vst [vmem:[%s149 + $0xf8] sm:$0xff] %v212
                %v214 = vld [vmem:[%s148 + $0x200] sm:$0xff]
                %215 = vst [vmem:[%s149 + $0x100] sm:$0xff] %v214
                %v216 = vld [vmem:[%s148 + $0x208] sm:$0xff]
                %217 = vst [vmem:[%s149 + $0x108] sm:$0xff] %v216
                %v218 = vld [vmem:[%s148 + $0x220] sm:$0xff]
                %219 = vst [vmem:[%s149 + $0x110] sm:$0xff] %v218
                %v220 = vld [vmem:[%s148 + $0x228] sm:$0xff]
                %221 = vst [vmem:[%s149 + $0x118] sm:$0xff] %v220
                %v222 = vld [vmem:[%s148 + $0x240] sm:$0xff]
                %223 = vst [vmem:[%s149 + $0x120] sm:$0xff] %v222
                %v224 = vld [vmem:[%s148 + $0x248] sm:$0xff]
                %225 = vst [vmem:[%s149 + $0x128] sm:$0xff] %v224
                %v226 = vld [vmem:[%s148 + $0x260] sm:$0xff]
                %227 = vst [vmem:[%s149 + $0x130] sm:$0xff] %v226
                %v228 = vld [vmem:[%s148 + $0x268] sm:$0xff]
                %229 = vst [vmem:[%s149 + $0x138] sm:$0xff] %v228
                %v230 = vld [vmem:[%s148 + $0x280] sm:$0xff]
                %231 = vst [vmem:[%s149 + $0x140] sm:$0xff] %v230
                %v232 = vld [vmem:[%s148 + $0x288] sm:$0xff]
                %233 = vst [vmem:[%s149 + $0x148] sm:$0xff] %v232
                %v234 = vld [vmem:[%s148 + $0x2a0] sm:$0xff]
                %235 = vst [vmem:[%s149 + $0x150] sm:$0xff] %v234
                %v236 = vld [vmem:[%s148 + $0x2a8] sm:$0xff]
                %237 = vst [vmem:[%s149 + $0x158] sm:$0xff] %v236
                %v238 = vld [vmem:[%s148 + $0x2c0] sm:$0xff]
                %239 = vst [vmem:[%s149 + $0x160] sm:$0xff] %v238
                %v240 = vld [vmem:[%s148 + $0x2c8] sm:$0xff]
                %241 = vst [vmem:[%s149 + $0x168] sm:$0xff] %v240
                %v242 = vld [vmem:[%s148 + $0x2e0] sm:$0xff]
                %243 = vst [vmem:[%s149 + $0x170] sm:$0xff] %v242
                %v244 = vld [vmem:[%s148 + $0x2e8] sm:$0xff]
                %245 = vst [vmem:[%s149 + $0x178] sm:$0xff] %v244
                %v246 = vld [vmem:[%s148 + $0x300] sm:$0xff]
                %247 = vst [vmem:[%s149 + $0x180] sm:$0xff] %v246
                %v248 = vld [vmem:[%s148 + $0x308] sm:$0xff]
                %249 = vst [vmem:[%s149 + $0x188] sm:$0xff] %v248
                %v250 = vld [vmem:[%s148 + $0x320] sm:$0xff]
                %251 = vst [vmem:[%s149 + $0x190] sm:$0xff] %v250
                %v252 = vld [vmem:[%s148 + $0x328] sm:$0xff]
                %253 = vst [vmem:[%s149 + $0x198] sm:$0xff] %v252
                %v254 = vld [vmem:[%s148 + $0x340] sm:$0xff]
                %255 = vst [vmem:[%s149 + $0x1a0] sm:$0xff] %v254
                %v256 = vld [vmem:[%s148 + $0x348] sm:$0xff]
                %257 = vst [vmem:[%s149 + $0x1a8] sm:$0xff] %v256
              $region41: #{_lambda_.6} parent=35 // loop_footer
                %s147 = sadd.s32 1, %s143
              $region42: #{_lambda_.6} parent=35 // loop_footer_branch
                %142 = sbr.rel target = $region38
              $region43: #{_lambda_.6} parent=35 // loop_exit
                _
            $region36: #{_lambda_.6} parent=31 // pred_fallthru
              _
            // Predicated region
            $region44: #{_lambda_.6} parent=31 // pred_check
              _
            $region45: #{_lambda_.6} parent=31 // pred_check_branch
              %259 = sbr.rel target = $region47
            $region46: #{_lambda_.6} parent=31 // pred_region
              _
            $region47: #{_lambda_.6} parent=31 // pred_fallthru
              _
          $region32: #{_lambda_.6} parent=27 // pred_fallthru
            _
          %260 = vnop
        $region28: #{_lambda_.6} parent=23 // pred_fallthru
          _
      $region24: #{_lambda_.6} parent=5 // pred_fallthru
        _
      %p261 = scmp.le.s32.totalorder 1, %s9
      %p262 = scmp.lt.s32.totalorder %s9, 3
      %p263 = pnand %p261, %p262
      %p264 = pneg %p263
      // Predicated region
      $region48: #{_lambda_.6} parent=5 // pred_check
        _
      $region49: #{_lambda_.6} parent=5 // pred_check_branch
        %266 = sbr.rel (%p263) target = $region51
      $region50: #{_lambda_.6} parent=5 // pred_region
        %s267 = ssub.s32 %s9, 1
        %s268 = sand.u32 %s43, 1
        %s269 = sand.u32 %s43, 1
        %s270 = smul.addr %s269, 432
        %s271 = scalar_lea.vmem [#allocation2], %s270
        // Predicated region
        $region52: #{_lambda_.6} parent=50 // pred_check
          %p272 = pneg %p56
        $region53: #{_lambda_.6} parent=50 // pred_check_branch
          %274 = sbr.rel (%p272) target = $region55
        $region54: #{_lambda_.6} parent=50 // pred_region
          _
        $region55: #{_lambda_.6} parent=50 // pred_fallthru
          _
        %p275 = pneg %p30
        %p276 = pneg %p27
        %s277 = sand.u32 %s43, 1
        %s278 = sand.u32 %s43, 1
        %s279 = smul.addr %s278, 432
        %s280 = scalar_lea.vmem [#allocation2], %s279
        %p281 = pneg %p56
        %p282 = pneg %p53
        %p283 = pneg %p77
        %p284 = pneg %p74
        %p285 = pneg %p103
        %p286 = pneg %p100
        %s287 = smul.u32 4, %s14
        %p288 = scmp.lt.s32.totalorder %s287, 7
        %s289 = scalar_select %p288, %s287, 7
        %s290 = smul.addr %s289, 8
        %s291 = scalar_lea.vmem %s3, %s290
        %s292 = smul.u32 4, %s14
        %s293 = smul.u32 4, %s14
        %p294 = scmp.lt.s32.totalorder %s293, 7
        %s295 = scalar_select %p294, %s293, 7
        %s296 = smul.addr %s295, 8
        %s297 = scalar_lea.vmem %s3, %s296
        %s298 = smul.u32 4, %s14
        %v300 = vld [vmem:[%s0] sm:$0xff]
        %v301 = vld [vmem:[%s271] sm:$0xff]
        %v302 = vld [vmem:[%s271 + $0x8] sm:$0xff]
        %v303 = vld [vmem:[%s271 + $0x10] sm:$0xff]
        %v304 = vld [vmem:[%s271 + $0x18] sm:$0xff]
        %v305 = vld [vmem:[%s271 + $0x20] sm:$0xff]
        %v306 = vld [vmem:[%s271 + $0x28] sm:$0xff]
        %v307 = vld [vmem:[%s271 + $0x30] sm:$0xff]
        %v308 = vld [vmem:[%s271 + $0x38] sm:$0xff]
        %v309 = vld [vmem:[%s271 + $0x40] sm:$0xff]
        %v310 = vld [vmem:[%s271 + $0x48] sm:$0xff]
        %v311 = vld [vmem:[%s271 + $0x50] sm:$0xff]
        %v312 = vld [vmem:[%s271 + $0x58] sm:$0xff]
        %v313 = vld [vmem:[%s271 + $0x60] sm:$0xff]
        %v314 = vld [vmem:[%s271 + $0x68] sm:$0xff]
        %v315 = vld [vmem:[%s271 + $0x70] sm:$0xff]
        %v316 = vld [vmem:[%s271 + $0x78] sm:$0xff]
        %v317 = vld [vmem:[%s271 + $0x80] sm:$0xff]
        %v318 = vld [vmem:[%s271 + $0x88] sm:$0xff]
        %v319 = vld [vmem:[%s271 + $0x90] sm:$0xff]
        %v320 = vld [vmem:[%s271 + $0x98] sm:$0xff]
        %v321 = vld [vmem:[%s271 + $0xa0] sm:$0xff]
        %v322 = vld [vmem:[%s271 + $0xa8] sm:$0xff]
        %v323 = vld [vmem:[%s271 + $0xb0] sm:$0xff]
        %v324 = vld [vmem:[%s271 + $0xb8] sm:$0xff]
        %v325 = vld [vmem:[%s271 + $0xc0] sm:$0xff]
        %v326 = vld [vmem:[%s271 + $0xc8] sm:$0xff]
        %v327 = vld [vmem:[%s271 + $0xd0] sm:$0xff]
        %v328 = vld [vmem:[%s271 + $0xd8] sm:$0xff]
        %v329 = vld [vmem:[%s271 + $0xe0] sm:$0xff]
        %v330 = vld [vmem:[%s271 + $0xe8] sm:$0xff]
        %v331 = vld [vmem:[%s271 + $0xf0] sm:$0xff]
        %v332 = vld [vmem:[%s271 + $0xf8] sm:$0xff]
        %v333 = vld [vmem:[%s271 + $0x100] sm:$0xff]
        %v334 = vld [vmem:[%s271 + $0x108] sm:$0xff]
        %v335 = vld [vmem:[%s271 + $0x110] sm:$0xff]
        %v336 = vld [vmem:[%s271 + $0x118] sm:$0xff]
        %v337 = vld [vmem:[%s271 + $0x120] sm:$0xff]
        %v338 = vld [vmem:[%s271 + $0x128] sm:$0xff]
        %v339 = vld [vmem:[%s271 + $0x130] sm:$0xff]
        %v340 = vld [vmem:[%s271 + $0x138] sm:$0xff]
        %v341 = vld [vmem:[%s271 + $0x140] sm:$0xff]
        %v342 = vld [vmem:[%s271 + $0x148] sm:$0xff]
        %v343 = vld [vmem:[%s271 + $0x150] sm:$0xff]
        %v344 = vld [vmem:[%s271 + $0x158] sm:$0xff]
        %v345 = vld [vmem:[%s271 + $0x160] sm:$0xff]
        %v346 = vld [vmem:[%s271 + $0x168] sm:$0xff]
        %v347 = vld [vmem:[%s271 + $0x170] sm:$0xff]
        %v348 = vld [vmem:[%s271 + $0x178] sm:$0xff]
        %v349 = vld [vmem:[%s271 + $0x180] sm:$0xff]
        %v350 = vld [vmem:[%s271 + $0x188] sm:$0xff]
        %v351 = vld [vmem:[%s271 + $0x190] sm:$0xff]
        %v352 = vld [vmem:[%s271 + $0x198] sm:$0xff]
        %v353 = vld [vmem:[%s271 + $0x1a0] sm:$0xff]
        %v354 = vld [vmem:[%s271 + $0x1a8] sm:$0xff]
        %v355 = vld [vmem:[%s2] sm:$0xff]
        %357 = vset.pattern.permute.xlu0 0
        %358 = vperm.xlu0 %357, %v355
        %v359 = vpop.permute.xlu0 %358
        %v362 = vunpack.c.l.b16 %v300
        %v363 = vunpack.c.h.b16 %v300
        %v364 = vpack.c.b16 %v362, %v362
        %v365 = vpack.c.b16 %v363, %v363
        %v421 = vunpack.c.l.b16 %v301
        %v422 = vunpack.c.h.b16 %v301
        %v423 = vunpack.c.l.b16 %v302
        %v424 = vunpack.c.h.b16 %v302
        %v425 = vunpack.c.l.b16 %v303
        %v426 = vunpack.c.h.b16 %v303
        %v427 = vunpack.c.l.b16 %v304
        %v428 = vunpack.c.h.b16 %v304
        %v429 = vunpack.c.l.b16 %v305
        %v430 = vunpack.c.h.b16 %v305
        %v431 = vunpack.c.l.b16 %v306
        %v432 = vunpack.c.h.b16 %v306
        %v433 = vunpack.c.l.b16 %v307
        %v434 = vunpack.c.h.b16 %v307
        %v435 = vunpack.c.l.b16 %v308
        %v436 = vunpack.c.h.b16 %v308
        %v437 = vunpack.c.l.b16 %v309
        %v438 = vunpack.c.h.b16 %v309
        %v439 = vunpack.c.l.b16 %v310
        %v440 = vunpack.c.h.b16 %v310
        %v441 = vunpack.c.l.b16 %v311
        %v442 = vunpack.c.h.b16 %v311
        %v443 = vunpack.c.l.b16 %v312
        %v444 = vunpack.c.h.b16 %v312
        %v445 = vunpack.c.l.b16 %v313
        %v446 = vunpack.c.h.b16 %v313
        %v447 = vunpack.c.l.b16 %v314
        %v448 = vunpack.c.h.b16 %v314
        %v449 = vunpack.c.l.b16 %v315
        %v450 = vunpack.c.h.b16 %v315
        %v451 = vunpack.c.l.b16 %v316
        %v452 = vunpack.c.h.b16 %v316
        %v453 = vunpack.c.l.b16 %v317
        %v454 = vunpack.c.h.b16 %v317
        %v455 = vunpack.c.l.b16 %v318
        %v456 = vunpack.c.h.b16 %v318
        %v457 = vunpack.c.l.b16 %v319
        %v458 = vunpack.c.h.b16 %v319
        %v459 = vunpack.c.l.b16 %v320
        %v460 = vunpack.c.h.b16 %v320
        %v461 = vunpack.c.l.b16 %v321
        %v462 = vunpack.c.h.b16 %v321
        %v463 = vunpack.c.l.b16 %v322
        %v464 = vunpack.c.h.b16 %v322
        %v465 = vunpack.c.l.b16 %v323
        %v466 = vunpack.c.h.b16 %v323
        %v467 = vunpack.c.l.b16 %v324
        %v468 = vunpack.c.h.b16 %v324
        %v469 = vunpack.c.l.b16 %v325
        %v470 = vunpack.c.h.b16 %v325
        %v471 = vunpack.c.l.b16 %v326
        %v472 = vunpack.c.h.b16 %v326
        %v473 = vunpack.c.l.b16 %v327
        %v474 = vunpack.c.h.b16 %v327
        %v475 = vunpack.c.l.b16 %v328
        %v476 = vunpack.c.h.b16 %v328
        %v477 = vunpack.c.l.b16 %v329
        %v478 = vunpack.c.h.b16 %v329
        %v479 = vunpack.c.l.b16 %v330
        %v480 = vunpack.c.h.b16 %v330
        %v481 = vunpack.c.l.b16 %v331
        %v482 = vunpack.c.h.b16 %v331
        %v483 = vunpack.c.l.b16 %v332
        %v484 = vunpack.c.h.b16 %v332
        %v485 = vunpack.c.l.b16 %v333
        %v486 = vunpack.c.h.b16 %v333
        %v487 = vunpack.c.l.b16 %v334
        %v488 = vunpack.c.h.b16 %v334
        %v489 = vunpack.c.l.b16 %v335
        %v490 = vunpack.c.h.b16 %v335
        %v491 = vunpack.c.l.b16 %v336
        %v492 = vunpack.c.h.b16 %v336
        %v493 = vunpack.c.l.b16 %v337
        %v494 = vunpack.c.h.b16 %v337
        %v495 = vunpack.c.l.b16 %v338
        %v496 = vunpack.c.h.b16 %v338
        %v497 = vunpack.c.l.b16 %v339
        %v498 = vunpack.c.h.b16 %v339
        %v499 = vunpack.c.l.b16 %v340
        %v500 = vunpack.c.h.b16 %v340
        %v501 = vunpack.c.l.b16 %v341
        %v502 = vunpack.c.h.b16 %v341
        %v503 = vunpack.c.l.b16 %v342
        %v504 = vunpack.c.h.b16 %v342
        %v505 = vunpack.c.l.b16 %v343
        %v506 = vunpack.c.h.b16 %v343
        %v507 = vunpack.c.l.b16 %v344
        %v508 = vunpack.c.h.b16 %v344
        %v509 = vunpack.c.l.b16 %v345
        %v510 = vunpack.c.h.b16 %v345
        %v511 = vunpack.c.l.b16 %v346
        %v512 = vunpack.c.h.b16 %v346
        %v513 = vunpack.c.l.b16 %v347
        %v514 = vunpack.c.h.b16 %v347
        %v515 = vunpack.c.l.b16 %v348
        %v516 = vunpack.c.h.b16 %v348
        %v517 = vunpack.c.l.b16 %v349
        %v518 = vunpack.c.h.b16 %v349
        %v519 = vunpack.c.l.b16 %v350
        %v520 = vunpack.c.h.b16 %v350
        %v521 = vunpack.c.l.b16 %v351
        %v522 = vunpack.c.h.b16 %v351
        %v523 = vunpack.c.l.b16 %v352
        %v524 = vunpack.c.h.b16 %v352
        %v525 = vunpack.c.l.b16 %v353
        %v526 = vunpack.c.h.b16 %v353
        %v527 = vunpack.c.l.b16 %v354
        %v528 = vunpack.c.h.b16 %v354
        %v529 = vpack.c.b16 %v425, %v421
        %v530 = vpack.c.b16 %v426, %v422
        %v531 = vpack.c.b16 %v427, %v423
        %v532 = vpack.c.b16 %v428, %v424
        %v533 = vpack.c.b16 %v433, %v429
        %v534 = vpack.c.b16 %v434, %v430
        %v535 = vpack.c.b16 %v435, %v431
        %v536 = vpack.c.b16 %v436, %v432
        %v537 = vpack.c.b16 %v441, %v437
        %v538 = vpack.c.b16 %v442, %v438
        %v539 = vpack.c.b16 %v443, %v439
        %v540 = vpack.c.b16 %v444, %v440
        %v541 = vpack.c.b16 %v449, %v445
        %v542 = vpack.c.b16 %v450, %v446
        %v543 = vpack.c.b16 %v451, %v447
        %v544 = vpack.c.b16 %v452, %v448
        %v545 = vpack.c.b16 %v457, %v453
        %v546 = vpack.c.b16 %v458, %v454
        %v547 = vpack.c.b16 %v459, %v455
        %v548 = vpack.c.b16 %v460, %v456
        %v549 = vpack.c.b16 %v465, %v461
        %v550 = vpack.c.b16 %v466, %v462
        %v551 = vpack.c.b16 %v467, %v463
        %v552 = vpack.c.b16 %v468, %v464
        %v553 = vpack.c.b16 %v473, %v469
        %v554 = vpack.c.b16 %v474, %v470
        %v555 = vpack.c.b16 %v475, %v471
        %v556 = vpack.c.b16 %v476, %v472
        %v557 = vpack.c.b16 %v481, %v477
        %v558 = vpack.c.b16 %v482, %v478
        %v559 = vpack.c.b16 %v483, %v479
        %v560 = vpack.c.b16 %v484, %v480
        %v561 = vpack.c.b16 %v489, %v485
        %v562 = vpack.c.b16 %v490, %v486
        %v563 = vpack.c.b16 %v491, %v487
        %v564 = vpack.c.b16 %v492, %v488
        %v565 = vpack.c.b16 %v497, %v493
        %v566 = vpack.c.b16 %v498, %v494
        %v567 = vpack.c.b16 %v499, %v495
        %v568 = vpack.c.b16 %v500, %v496
        %v569 = vpack.c.b16 %v505, %v501
        %v570 = vpack.c.b16 %v506, %v502
        %v571 = vpack.c.b16 %v507, %v503
        %v572 = vpack.c.b16 %v508, %v504
        %v573 = vpack.c.b16 %v513, %v509
        %v574 = vpack.c.b16 %v514, %v510
        %v575 = vpack.c.b16 %v515, %v511
        %v576 = vpack.c.b16 %v516, %v512
        %v577 = vpack.c.b16 %v521, %v517
        %v578 = vpack.c.b16 %v522, %v518
        %v579 = vpack.c.b16 %v523, %v519
        %v580 = vpack.c.b16 %v524, %v520
        %v581 = vpack.c.b16 %v525, %v525
        %v582 = vpack.c.b16 %v526, %v526
        %v583 = vpack.c.b16 %v527, %v527
        %v584 = vpack.c.b16 %v528, %v528
        %vm637 = vcmask 719872
        %v639 = vsel %vm637, %v365, 0
        %vm641 = vcmask 1043456
        %v643 = vsel %vm641, %v581, 0
        %v646 = vsel %vm641, %v582, 0
        %v649 = vsel %vm641, %v583, 0
        %v652 = vsel %vm641, %v584, 0
        %654 = vmatprep.subr.bf16.mxu0 %v530
        %655 = vmatpush1.bf16.msra.mxu0 %v529
        %656 = vmatprep.subr.bf16.mxu0 %v534
        %657 = vmatpush1.bf16.msra.mxu0 %v533
        %658 = vmatprep.subr.bf16.mxu0 %v538
        %659 = vmatpush1.bf16.msra.mxu0 %v537
        %660 = vmatprep.subr.bf16.mxu0 %v542
        %661 = vmatpush1.bf16.msra.mxu0 %v541
        %662 = vmatprep.subr.bf16.mxu0 %v546
        %663 = vmatpush1.bf16.msra.mxu0 %v545
        %664 = vmatprep.subr.bf16.mxu0 %v550
        %665 = vmatpush1.bf16.msra.mxu0 %v549
        %666 = vmatprep.subr.bf16.mxu0 %v554
        %667 = vmatpush1.bf16.msra.mxu0 %v553
        %668 = vmatprep.subr.bf16.mxu0 %v558
        %669 = vmatpush1.bf16.msra.mxu0 %v557
        %670 = vmatprep.subr.bf16.mxu0 %v562
        %671 = vmatpush1.bf16.msra.mxu0 %v561
        %672 = vmatprep.subr.bf16.mxu0 %v566
        %673 = vmatpush1.bf16.msra.mxu0 %v565
        %674 = vmatprep.subr.bf16.mxu0 %v570
        %675 = vmatpush1.bf16.msra.mxu0 %v569
        %676 = vmatprep.subr.bf16.mxu0 %v574
        %677 = vmatpush1.bf16.msra.mxu0 %v573
        %678 = vmatprep.subr.bf16.mxu0 %v578
        %679 = vmatpush1.bf16.msra.mxu0 %v577
        %680 = vmatprep.subr.bf16.mxu0 %v646
        %681 = vmatpush1.bf16.msra.mxu0 %v643
        %682 = vmatprep.subr.bf16.mxu0 0
        %683 = vmatpush1.bf16.msra.mxu0 0
        %684 = vmatprep.subr.bf16.mxu0 0
        %685 = vmatpush1.bf16.msra.mxu0 0
        %686 = vmatprep.mubr.bf16.mxu0 %v639
        %687 = vmatmul.mubr.bf16.gmra.mrb[0].mxu0 %v364
        %v688 = vpop.f32.mrb[0].mxu0
        %v689 = vadd.f32 %v359, %v688
        %v690 = vpop.f32.mrb[0].mxu0
        %v691 = vadd.f32 %v359, %v690
        %v692 = vpop.f32.mrb[0].mxu0
        %v693 = vpop.f32.mrb[0].mxu0
        %694 = vdwg.mxu0
        %695 = vmatprep.subr.bf16.mxu0 %v532
        %696 = vmatpush1.bf16.msra.mxu0 %v531
        %697 = vmatprep.subr.bf16.mxu0 %v536
        %698 = vmatpush1.bf16.msra.mxu0 %v535
        %699 = vmatprep.subr.bf16.mxu0 %v540
        %700 = vmatpush1.bf16.msra.mxu0 %v539
        %701 = vmatprep.subr.bf16.mxu0 %v544
        %702 = vmatpush1.bf16.msra.mxu0 %v543
        %703 = vmatprep.subr.bf16.mxu0 %v548
        %704 = vmatpush1.bf16.msra.mxu0 %v547
        %705 = vmatprep.subr.bf16.mxu0 %v552
        %706 = vmatpush1.bf16.msra.mxu0 %v551
        %707 = vmatprep.subr.bf16.mxu0 %v556
        %708 = vmatpush1.bf16.msra.mxu0 %v555
        %709 = vmatprep.subr.bf16.mxu0 %v560
        %710 = vmatpush1.bf16.msra.mxu0 %v559
        %711 = vmatprep.subr.bf16.mxu0 %v564
        %712 = vmatpush1.bf16.msra.mxu0 %v563
        %713 = vmatprep.subr.bf16.mxu0 %v568
        %714 = vmatpush1.bf16.msra.mxu0 %v567
        %715 = vmatprep.subr.bf16.mxu0 %v572
        %716 = vmatpush1.bf16.msra.mxu0 %v571
        %717 = vmatprep.subr.bf16.mxu0 %v576
        %718 = vmatpush1.bf16.msra.mxu0 %v575
        %719 = vmatprep.subr.bf16.mxu0 %v580
        %720 = vmatpush1.bf16.msra.mxu0 %v579
        %721 = vmatprep.subr.bf16.mxu0 %v652
        %722 = vmatpush1.bf16.msra.mxu0 %v649
        %723 = vmatprep.subr.bf16.mxu0 0
        %724 = vmatpush1.bf16.msra.mxu0 0
        %725 = vmatprep.subr.bf16.mxu0 0
        %726 = vmatpush1.bf16.msra.mxu0 0
        %727 = vmatprep.mubr.bf16.mxu0 %v639
        %728 = vmatmul.mubr.bf16.gmra.mrb[0].mxu0 %v364
        %v729 = vpop.f32.mrb[0].mxu0
        %v730 = vadd.f32 %v359, %v729
        %v731 = vpop.f32.mrb[0].mxu0
        %v732 = vadd.f32 %v359, %v731
        %v733 = vpop.f32.mrb[0].mxu0
        %v734 = vpop.f32.mrb[0].mxu0
        %735 = vdwg.mxu0
        %736 = vst [vmem:[%s297] sm:$0xff] %v689
        %737 = vst [vmem:[%s297 + $0x8] sm:$0xff] %v691
        %738 = vst [vmem:[%s297 + $0x10] sm:$0xff] %v730
        %739 = vst [vmem:[%s297 + $0x18] sm:$0xff] %v732
        %s740 = smul.u32 4, %s14
        %p741 = scmp.lt.s32.totalorder %s740, 7
        %s742 = scalar_select %p741, %s740, 7
        %s743 = smul.addr %s742, 8
        %s744 = scalar_lea.vmem %s3, %s743
        // Predicated region
        $region56: #{_lambda_.6} parent=50 // pred_check
          %p745 = pneg %p100
        $region57: #{_lambda_.6} parent=50 // pred_check_branch
          %747 = sbr.rel (%p745) target = $region59
        $region58: #{_lambda_.6} parent=50 // pred_region
          %s748 = smul.u32 4, %s14
        $region59: #{_lambda_.6} parent=50 // pred_fallthru
          _
      $region51: #{_lambda_.6} parent=5 // pred_fallthru
        _
      %p749 = scmp.le.s32.totalorder 2, %s9
      // Predicated region
      $region60: #{_lambda_.6} parent=5 // pred_check
        %p750 = pneg %p749
      $region61: #{_lambda_.6} parent=5 // pred_check_branch
        %752 = sbr.rel (%p750) target = $region63
      $region62: #{_lambda_.6} parent=5 // pred_region
        %s753 = ssub.s32 %s9, 2
        // Predicated region
        $region64: #{_lambda_.6} parent=62 // pred_check
          %p754 = pneg %p106
        $region65: #{_lambda_.6} parent=62 // pred_check_branch
          %756 = sbr.rel (%p754) target = $region67
        $region66: #{_lambda_.6} parent=62 // pred_region
          %s757 = smul.u32 4, %s15
          %p758 = scmp.lt.s32.totalorder %s757, 7
          %s759 = scalar_select %p758, %s757, 7
          %s760 = smul.addr %s759, 8
          %s761 = scalar_lea.vmem %s3, %s760
        $region67: #{_lambda_.6} parent=62 // pred_fallthru
          _
      $region63: #{_lambda_.6} parent=5 // pred_fallthru
        _
    $region6: #{_lambda_.6} parent=1 // loop_footer
      %s13 = sadd.s32 1, %s9
    $region7: #{_lambda_.6} parent=1 // loop_footer_branch
      %8 = sbr.rel target = $region3
    $region8: #{_lambda_.6} parent=1 // loop_exit
      _

</llo_original>
